<compile_context>
chip_gen: v7x
topology: tpu7x:2x2x1
jax: 0.10.0
libtpu: 0.0.40
codegen_flags: <defaults>
</compile_context>

<pallas_src>
import jax
import jax.numpy as jnp
from jax.experimental import pallas as pl
from jax.experimental.pallas import tpu as pltpu

INPUT_SIZE = 28 * 28   # 784
HIDDEN = 512
OUTPUT_SIZE = 10
OUT_PAD = 128          # lane-dense padded logits width
TM_MAX = 512           # max batch-tile rows (a few MiB of VMEM even at 512)


def _round_up(n, m):
    return ((n + m - 1) // m) * m


def _choose_tile_m(B):
    """Batch tile: sublane-aligned; >=2 grid steps once B >= 64 (feeds both
    v7x TensorCores); multiples of 128 when the half-batch allows (MXU-M
    utilization on v5e, also fine on v6e/v7x's 256-tall MXU)."""
    Bp8 = _round_up(max(B, 1), 8)
    if B < 64:
        return min(Bp8, TM_MAX)
    half = -(-Bp8 // 2)                  # ceil(Bp8 / 2) -> at least 2 grid steps
    if half >= 128:
        tm = (half // 128) * 128         # floor to a 128-multiple
    else:
        tm = _round_up(half, 8)
    return min(tm, TM_MAX)


def mlp_kernel(x_ref, w1_ref, b1_ref, w2_ref, b2_ref, w3_ref, b3_ref, o_ref):
    # In-kernel f32 -> bf16 cast of the activations (saves HBM traffic vs a
    # wrapper-side convert); dots run bf16 x bf16 on the MXU with f32 accumulate.
    x = x_ref[...].astype(jnp.bfloat16)
    # Layer 1: Linear(784 -> 512) + ReLU.
    h1 = jnp.dot(x, w1_ref[...], preferred_element_type=jnp.float32)
    h1 = jnp.maximum(h1 + b1_ref[...], 0.0)          # f32 elementwise (VPU)
    # Layer 2: Linear(512 -> 512) + ReLU.
    h2 = jnp.dot(h1.astype(jnp.bfloat16), w2_ref[...],
                 preferred_element_type=jnp.float32)
    h2 = jnp.maximum(h2 + b2_ref[...], 0.0)
    # Layer 3: Linear(512 -> 128-padded logits), no activation.
    logits = jnp.dot(h2.astype(jnp.bfloat16), w3_ref[...],
                     preferred_element_type=jnp.float32)
    o_ref[...] = (logits + b3_ref[...]).astype(o_ref.dtype)


@jax.jit
def neural_network_forward(x_nchw, params):
    """x_nchw: (B, 1, 28, 28) float32. params from init_params (w3/b3 pre-padded
    to 128 columns). Returns logits (B, 10) float32."""
    w1, b1, w2, b2, w3p, b3p = params
    B = x_nchw.shape[0]

    # nn.Flatten(): flatten all dims after batch. Stays f32; cast is in-kernel.
    x = x_nchw.reshape(B, -1)                                    # (B, 784) f32

    tm = _choose_tile_m(B)
    Bp = _round_up(B, tm)
    if Bp != B:
        x = jnp.pad(x, ((0, Bp - B), (0, 0)))
    grid = (Bp // tm,)

    const = lambda i: (0, 0)   # weights/biases: fetched once, stay VMEM-resident

    out_padded = pl.pallas_call(
        mlp_kernel,
        out_shape=jax.ShapeDtypeStruct((Bp, OUT_PAD), jnp.float32),
        grid_spec=pltpu.PrefetchScalarGridSpec(
            num_scalar_prefetch=0,
            grid=grid,
            in_specs=[
                pl.BlockSpec((tm, INPUT_SIZE), lambda i: (i, 0)),   # x tile (f32)
                pl.BlockSpec((INPUT_SIZE, HIDDEN), const),          # w1 (bf16)
                pl.BlockSpec((1, HIDDEN), const),                   # b1 (f32)
                pl.BlockSpec((HIDDEN, HIDDEN), const),              # w2 (bf16)
                pl.BlockSpec((1, HIDDEN), const),                   # b2 (f32)
                pl.BlockSpec((HIDDEN, OUT_PAD), const),             # w3 padded bf16
                pl.BlockSpec((1, OUT_PAD), const),                  # b3 padded f32
            ],
            out_specs=pl.BlockSpec((tm, OUT_PAD), lambda i: (i, 0)),
        ),
        compiler_params=pltpu.CompilerParams(
            # Batch axis is fully independent -> shardable across v7x's two TCs.
            dimension_semantics=("parallel",),
        ),
    )(x, w1, b1, w2, b2, w3p, b3p)

    return out_padded[:B, :OUTPUT_SIZE]


def init_params(key):
    """PyTorch-nn.Linear-style uniform(-1/sqrt(fan_in), 1/sqrt(fan_in)) init.

    Weights stored as (in_features, out_features) bf16 (bandwidth + native MXU
    path); biases f32 (tiny, keeps the elementwise path f32 on v5e). The last
    layer is pre-padded once to a lane-dense 128-wide output here, so the
    serving path carries no per-call pad."""
    ks = jax.random.split(key, 6)

    def linear(kw, kb, fan_in, fan_out):
        bound = 1.0 / jnp.sqrt(fan_in)
        w = jax.random.uniform(kw, (fan_in, fan_out), jnp.float32, -bound, bound)
        b = jax.random.uniform(kb, (1, fan_out), jnp.float32, -bound, bound)
        return w.astype(jnp.bfloat16), b

    w1, b1 = linear(ks[0], ks[1], INPUT_SIZE, HIDDEN)
    w2, b2 = linear(ks[2], ks[3], HIDDEN, HIDDEN)
    w3, b3 = linear(ks[4], ks[5], HIDDEN, OUTPUT_SIZE)
    # Pad the 10-wide layer-3 outputs to 128 columns (done once, at init).
    w3p = jnp.pad(w3, ((0, 0), (0, OUT_PAD - OUTPUT_SIZE)))     # (512, 128) bf16
    b3p = jnp.pad(b3, ((0, 0), (0, OUT_PAD - OUTPUT_SIZE)))     # (1, 128) f32
    return (w1, b1, w2, b2, w3p, b3p)


if __name__ == "__main__":
    key = jax.random.PRNGKey(0)
    k_params, k_x = jax.random.split(key)

    params = init_params(k_params)
    # Small batch of MNIST-shaped inputs, NCHW like PyTorch. (Kernel is most
    # efficient at B >= 128/256 where the resident weights are amortized.)
    B = 32
    x = jax.random.normal(k_x, (B, 1, 28, 28), dtype=jnp.float32)

    logits = neural_network_forward(x, params)
    logits = jax.block_until_ready(logits)

    # Sanity check against a plain-JAX reference that mirrors the kernel's
    # dtype handling (bf16 dot inputs, f32 accumulate / bias / ReLU).
    w1, b1, w2, b2, w3p, b3p = params
    w1f = w1.astype(jnp.float32)
    w2f = w2.astype(jnp.float32)
    w3f = w3p[:, :OUTPUT_SIZE].astype(jnp.float32)
    b3 = b3p[:, :OUTPUT_SIZE]
    xf = x.reshape(B, -1).astype(jnp.bfloat16).astype(jnp.float32)
    h = jnp.maximum(xf @ w1f + b1, 0.0)
    h = jnp.maximum(h.astype(jnp.bfloat16).astype(jnp.float32) @ w2f + b2, 0.0)
    ref = h.astype(jnp.bfloat16).astype(jnp.float32) @ w3f + b3

    assert logits.shape == (B, OUTPUT_SIZE)
    assert jnp.allclose(logits, ref, atol=5e-3, rtol=5e-3)

    print("KERNEL_OK")
</pallas_src>

<mosaic_0001>
module attributes {stable_mosaic.version = 11 : i64} {
  func.func @mlp_kernel(%arg0: i32, %arg1: memref<32x784xf32, #tpu.memory_space<vmem>>, %arg2: memref<784x512xbf16, #tpu.memory_space<vmem>>, %arg3: memref<1x512xf32, #tpu.memory_space<vmem>>, %arg4: memref<512x512xbf16, #tpu.memory_space<vmem>>, %arg5: memref<1x512xf32, #tpu.memory_space<vmem>>, %arg6: memref<512x128xbf16, #tpu.memory_space<vmem>>, %arg7: memref<1x128xf32, #tpu.memory_space<vmem>>, %arg8: memref<32x128xf32, #tpu.memory_space<vmem>>) attributes {dimension_semantics = [#tpu.dimension_semantics<parallel>], iteration_bounds = array<i64: 1>, scalar_prefetch = 0 : i64, scratch_operands = 0 : i64, tpu.core_type = #tpu.core_type<tc>, window_params = [{transform_indices = @transform_0, window_bounds = array<i64: 32, 784>}, {pipeline_mode = #tpu.pipeline_mode<synchronous>, transform_indices = @transform_1, window_bounds = array<i64: 784, 512>}, {pipeline_mode = #tpu.pipeline_mode<synchronous>, transform_indices = @transform_2, window_bounds = array<i64: 1, 512>}, {pipeline_mode = #tpu.pipeline_mode<synchronous>, transform_indices = @transform_3, window_bounds = array<i64: 512, 512>}, {pipeline_mode = #tpu.pipeline_mode<synchronous>, transform_indices = @transform_4, window_bounds = array<i64: 1, 512>}, {pipeline_mode = #tpu.pipeline_mode<synchronous>, transform_indices = @transform_5, window_bounds = array<i64: 512, 128>}, {pipeline_mode = #tpu.pipeline_mode<synchronous>, transform_indices = @transform_6, window_bounds = array<i64: 1, 128>}, {transform_indices = @transform_7, window_bounds = array<i64: 32, 128>}]} {
    %c0 = arith.constant 0 : index
    %c0_0 = arith.constant 0 : index
    %0 = vector.load %arg1[%c0, %c0_0] : memref<32x784xf32, #tpu.memory_space<vmem>>, vector<32x784xf32>
    %1 = arith.truncf %0 : vector<32x784xf32> to vector<32x784xbf16>
    %c0_1 = arith.constant 0 : index
    %c0_2 = arith.constant 0 : index
    %2 = vector.load %arg2[%c0_1, %c0_2] : memref<784x512xbf16, #tpu.memory_space<vmem>>, vector<784x512xbf16>
    %cst = arith.constant dense<0.000000e+00> : vector<32x512xf32>
    %3 = tpu.matmul %1, %2, %cst {dimension_numbers = #tpu.dot_dimension_numbers<[1], [0], [0], [1], [0, 0, 1, 1], [], []>} : vector<32x784xbf16>, vector<784x512xbf16>, vector<32x512xf32> -> vector<32x512xf32>
    %c0_3 = arith.constant 0 : index
    %c0_4 = arith.constant 0 : index
    %4 = vector.load %arg3[%c0_3, %c0_4] : memref<1x512xf32, #tpu.memory_space<vmem>>, vector<1x512xf32>
    %5 = vector.broadcast %4 : vector<1x512xf32> to vector<32x512xf32>
    %6 = arith.addf %3, %5 : vector<32x512xf32>
    %cst_5 = arith.constant 0.000000e+00 : f32
    %7 = vector.broadcast %cst_5 : f32 to vector<32x512xf32>
    %8 = arith.maximumf %6, %7 : vector<32x512xf32>
    %9 = arith.truncf %8 : vector<32x512xf32> to vector<32x512xbf16>
    %c0_6 = arith.constant 0 : index
    %c0_7 = arith.constant 0 : index
    %10 = vector.load %arg4[%c0_6, %c0_7] : memref<512x512xbf16, #tpu.memory_space<vmem>>, vector<512x512xbf16>
    %cst_8 = arith.constant dense<0.000000e+00> : vector<32x512xf32>
    %11 = tpu.matmul %9, %10, %cst_8 {dimension_numbers = #tpu.dot_dimension_numbers<[1], [0], [0], [1], [0, 0, 1, 1], [], []>} : vector<32x512xbf16>, vector<512x512xbf16>, vector<32x512xf32> -> vector<32x512xf32>
    %c0_9 = arith.constant 0 : index
    %c0_10 = arith.constant 0 : index
    %12 = vector.load %arg5[%c0_9, %c0_10] : memref<1x512xf32, #tpu.memory_space<vmem>>, vector<1x512xf32>
    %13 = vector.broadcast %12 : vector<1x512xf32> to vector<32x512xf32>
    %14 = arith.addf %11, %13 : vector<32x512xf32>
    %cst_11 = arith.constant 0.000000e+00 : f32
    %15 = vector.broadcast %cst_11 : f32 to vector<32x512xf32>
    %16 = arith.maximumf %14, %15 : vector<32x512xf32>
    %17 = arith.truncf %16 : vector<32x512xf32> to vector<32x512xbf16>
    %c0_12 = arith.constant 0 : index
    %c0_13 = arith.constant 0 : index
    %18 = vector.load %arg6[%c0_12, %c0_13] : memref<512x128xbf16, #tpu.memory_space<vmem>>, vector<512x128xbf16>
    %cst_14 = arith.constant dense<0.000000e+00> : vector<32x128xf32>
    %19 = tpu.matmul %17, %18, %cst_14 {dimension_numbers = #tpu.dot_dimension_numbers<[1], [0], [0], [1], [0, 0, 1, 1], [], []>} : vector<32x512xbf16>, vector<512x128xbf16>, vector<32x128xf32> -> vector<32x128xf32>
    %c0_15 = arith.constant 0 : index
    %c0_16 = arith.constant 0 : index
    %20 = vector.load %arg7[%c0_15, %c0_16] : memref<1x128xf32, #tpu.memory_space<vmem>>, vector<1x128xf32>
    %21 = vector.broadcast %20 : vector<1x128xf32> to vector<32x128xf32>
    %22 = arith.addf %19, %21 : vector<32x128xf32>
    %c0_17 = arith.constant 0 : index
    %c0_18 = arith.constant 0 : index
    %23 = vector.load %arg8[%c0_17, %c0_18] : memref<32x128xf32, #tpu.memory_space<vmem>>, vector<32x128xf32>
    tpu.vector_store %arg8[%c0_17, %c0_18], %22 {strides = array<i32>} : memref<32x128xf32, #tpu.memory_space<vmem>>, vector<32x128xf32>,
    return
  }
  func.func @transform_0(%arg0: i32) -> (i32, i32) {
    %c0_i32 = arith.constant 0 : i32
    %c0_i32_0 = arith.constant 0 : i32
    return %arg0, %c0_i32 : i32, i32
  }
  func.func @transform_1(%arg0: i32) -> (i32, i32) {
    %c0_i32 = arith.constant 0 : i32
    %c0_i32_0 = arith.constant 0 : i32
    %c0_i32_1 = arith.constant 0 : i32
    return %c0_i32, %c0_i32_0 : i32, i32
  }
  func.func @transform_2(%arg0: i32) -> (i32, i32) {
    %c0_i32 = arith.constant 0 : i32
    %c0_i32_0 = arith.constant 0 : i32
    %c0_i32_1 = arith.constant 0 : i32
    return %c0_i32, %c0_i32_0 : i32, i32
  }
  func.func @transform_3(%arg0: i32) -> (i32, i32) {
    %c0_i32 = arith.constant 0 : i32
    %c0_i32_0 = arith.constant 0 : i32
    %c0_i32_1 = arith.constant 0 : i32
    return %c0_i32, %c0_i32_0 : i32, i32
  }
  func.func @transform_4(%arg0: i32) -> (i32, i32) {
    %c0_i32 = arith.constant 0 : i32
    %c0_i32_0 = arith.constant 0 : i32
    %c0_i32_1 = arith.constant 0 : i32
    return %c0_i32, %c0_i32_0 : i32, i32
  }
  func.func @transform_5(%arg0: i32) -> (i32, i32) {
    %c0_i32 = arith.constant 0 : i32
    %c0_i32_0 = arith.constant 0 : i32
    %c0_i32_1 = arith.constant 0 : i32
    return %c0_i32, %c0_i32_0 : i32, i32
  }
  func.func @transform_6(%arg0: i32) -> (i32, i32) {
    %c0_i32 = arith.constant 0 : i32
    %c0_i32_0 = arith.constant 0 : i32
    %c0_i32_1 = arith.constant 0 : i32
    return %c0_i32, %c0_i32_0 : i32, i32
  }
  func.func @transform_7(%arg0: i32) -> (i32, i32) {
    %c0_i32 = arith.constant 0 : i32
    %c0_i32_0 = arith.constant 0 : i32
    return %arg0, %c0_i32 : i32, i32
  }
}

</mosaic_0001>

<llo_original>
// kernel: neural_network_forward.1
$region0: #{neural_network_forward.1}
  #allocation0 [shape = 'u32[]', space=smem, size = 0x4, offset = 0x4, fixed_abs, tag = 'smem constant byte address 0x4 - core index']
  #allocation1 [shape = 'u32[144,128]{1,0:T(1,128)}', space=vmem, size = 0x12000, scoped, tag = 'internal scratch']
  %s0 = inlined_call_operand.vmem [shape: f32[32,784], index: 0, kind: input, shape index: {}]
  %s1 = inlined_call_operand.hbm [shape: bf16[784,512], index: 1, kind: input, shape index: {}]
  %s2 = inlined_call_operand.vmem [shape: f32[1,512], index: 2, kind: input, shape index: {}]
  %s3 = inlined_call_operand.hbm [shape: bf16[512,512], index: 3, kind: input, shape index: {}]
  %s4 = inlined_call_operand.vmem [shape: f32[1,512], index: 4, kind: input, shape index: {}]
  %s5 = inlined_call_operand.vmem [shape: bf16[512,128], index: 5, kind: input, shape index: {}]
  %s6 = inlined_call_operand.vmem [shape: f32[1,128], index: 6, kind: input, shape index: {}]
  %s7 = inlined_call_operand.vmem [shape: f32[32,128], index: 7, kind: output, shape index: {}]
  %s8 = sld [smem:[#allocation0]]
  $region46: #{neural_network_forward.1} parent=0
    _
  %s10 = ssub.s32 1, %s8
  %s11 = scalar_select 0, %s10, %s8
  $region1: #{neural_network_forward.1} parent=0
    #allocation2 [shape = 'u8[802816]{0}', space=vmem, size = 0xc4000, scoped, tag = 'input window, operand 1, single buffered']
    #allocation3 [shape = 's32[1]{0}', space=sflag, size = 0x4, scoped, tag = 'scoped memory for neural_network_forward.1']
    #allocation4 [shape = 'u8[524288]{0}', space=vmem, size = 0x80000, scoped, tag = 'input window, operand 3, single buffered']
    #allocation5 [shape = 's32[1]{0}', space=sflag, size = 0x4, scoped, tag = 'scoped memory for neural_network_forward.1']
    %12 = vsyncpa [#allocation3], 0
    %13 = vsyncpa [#allocation5], 0
    // Predicated region
    $region2: #{neural_network_forward.1} parent=1 // pred_check
      _
    $region3: #{neural_network_forward.1} parent=1 // pred_check_branch
      %15 = sbr.rel (0) target = $region5
    $region4: #{neural_network_forward.1} parent=1 // pred_region
      _
    $region5: #{neural_network_forward.1} parent=1 // pred_fallthru
      _
    // Predicated region
    $region6: #{neural_network_forward.1} parent=1 // pred_check
      _
    $region7: #{neural_network_forward.1} parent=1 // pred_check_branch
      %17 = sbr.rel (0) target = $region9
    $region8: #{neural_network_forward.1} parent=1 // pred_region
      %s19 = ssub.s32 25088, 25088
      %20 = vsyncadd [#allocation3], %s19
      %s21 = sshll.u32 [#allocation2], 4
      %s22 = int_to_ptr.vmem [resolvable:$true] %s21
      %27 = dma.hbm_to_vmem [thread:$0]  %s1, 25088, %s22, [#allocation3], 256, 256, 16
    $region9: #{neural_network_forward.1} parent=1 // pred_fallthru
      _
    // Predicated region
    $region10: #{neural_network_forward.1} parent=1 // pred_check
      _
    $region11: #{neural_network_forward.1} parent=1 // pred_check_branch
      %29 = sbr.rel (0) target = $region13
    $region12: #{neural_network_forward.1} parent=1 // pred_region
      _
    $region13: #{neural_network_forward.1} parent=1 // pred_fallthru
      _
    // Predicated region
    $region14: #{neural_network_forward.1} parent=1 // pred_check
      _
    $region15: #{neural_network_forward.1} parent=1 // pred_check_branch
      %31 = sbr.rel (0) target = $region17
    $region16: #{neural_network_forward.1} parent=1 // pred_region
      %s33 = ssub.s32 16384, 16384
      %34 = vsyncadd [#allocation5], %s33
      %s35 = sshll.u32 [#allocation4], 4
      %s36 = int_to_ptr.vmem [resolvable:$true] %s35
      %41 = dma.hbm_to_vmem [thread:$0]  %s3, 16384, %s36, [#allocation5], 256, 256, 16
    $region17: #{neural_network_forward.1} parent=1 // pred_fallthru
      _
    // Predicated region
    $region18: #{neural_network_forward.1} parent=1 // pred_check
      _
    $region19: #{neural_network_forward.1} parent=1 // pred_check_branch
      %43 = sbr.rel (0) target = $region21
    $region20: #{neural_network_forward.1} parent=1 // pred_region
      _
    $region21: #{neural_network_forward.1} parent=1 // pred_fallthru
      _
    // Predicated region
    $region22: #{neural_network_forward.1} parent=1 // pred_check
      _
    $region23: #{neural_network_forward.1} parent=1 // pred_check_branch
      %45 = sbr.rel (0) target = $region25
    $region24: #{neural_network_forward.1} parent=1 // pred_region
      _
    $region25: #{neural_network_forward.1} parent=1 // pred_fallthru
      _
    // Predicated region
    $region26: #{neural_network_forward.1} parent=1 // pred_check
      _
    $region27: #{neural_network_forward.1} parent=1 // pred_check_branch
      %47 = sbr.rel (0) target = $region29
    $region28: #{neural_network_forward.1} parent=1 // pred_region
      _
    $region29: #{neural_network_forward.1} parent=1 // pred_fallthru
      _
    // Predicated region
    $region30: #{neural_network_forward.1} parent=1 // pred_check
      _
    $region31: #{neural_network_forward.1} parent=1 // pred_check_branch
      %49 = sbr.rel (0) target = $region33
    $region32: #{neural_network_forward.1} parent=1 // pred_region
      %50 = dma.done [#allocation3], 25088
    $region33: #{neural_network_forward.1} parent=1 // pred_fallthru
      _
    // Predicated region
    $region34: #{neural_network_forward.1} parent=1 // pred_check
      _
    $region35: #{neural_network_forward.1} parent=1 // pred_check_branch
      %52 = sbr.rel (0) target = $region37
    $region36: #{neural_network_forward.1} parent=1 // pred_region
      %53 = dma.done [#allocation5], 16384
    $region37: #{neural_network_forward.1} parent=1 // pred_fallthru
      _
    %v55 = vld [vmem:[%s0] sm:$0xff]
    %v56 = vld [vmem:[%s0 + $0x8] sm:$0xff]
    %v57 = vld [vmem:[%s0 + $0x10] sm:$0xff]
    %v58 = vld [vmem:[%s0 + $0x18] sm:$0xff]
    %v59 = vld [vmem:[%s0 + $0x20] sm:$0xff]
    %v60 = vld [vmem:[%s0 + $0x28] sm:$0xff]
    %v61 = vld [vmem:[%s0 + $0x30] sm:$0xff]
    %v62 = vld [vmem:[%s0 + $0x38] sm:$0xff]
    %v63 = vld [vmem:[%s0 + $0x40] sm:$0xff]
    %v64 = vld [vmem:[%s0 + $0x48] sm:$0xff]
    %v65 = vld [vmem:[%s0 + $0x50] sm:$0xff]
    %v66 = vld [vmem:[%s0 + $0x58] sm:$0xff]
    %v67 = vld [vmem:[%s0 + $0x60] sm:$0xff]
    %v68 = vld [vmem:[%s0 + $0x68] sm:$0xff]
    %v69 = vld [vmem:[%s0 + $0x70] sm:$0xff]
    %v70 = vld [vmem:[%s0 + $0x78] sm:$0xff]
    %v71 = vld [vmem:[%s0 + $0x80] sm:$0xff]
    %v72 = vld [vmem:[%s0 + $0x88] sm:$0xff]
    %v73 = vld [vmem:[%s0 + $0x90] sm:$0xff]
    %v74 = vld [vmem:[%s0 + $0x98] sm:$0xff]
    %v75 = vld [vmem:[%s0 + $0xa0] sm:$0xff]
    %v76 = vld [vmem:[%s0 + $0xa8] sm:$0xff]
    %v77 = vld [vmem:[%s0 + $0xb0] sm:$0xff]
    %v78 = vld [vmem:[%s0 + $0xb8] sm:$0xff]
    %v79 = vld [vmem:[%s0 + $0xc0] sm:$0xff]
    %v80 = vld [vmem:[%s0 + $0xc8] sm:$0xff]
    %v81 = vld [vmem:[%s0 + $0xd0] sm:$0xff]
    %v82 = vld [vmem:[%s0 + $0xd8] sm:$0xff]
    %v83 = vpack.c.bf16 %v62, %v55
    %v84 = vpack.c.bf16 %v63, %v56
    %v85 = vpack.c.bf16 %v64, %v57
    %v86 = vpack.c.bf16 %v65, %v58
    %v87 = vpack.c.bf16 %v66, %v59
    %v88 = vpack.c.bf16 %v67, %v60
    %v89 = vpack.c.bf16 %v68, %v61
    %v90 = vpack.c.bf16 %v76, %v69
    %v91 = vpack.c.bf16 %v77, %v70
    %v92 = vpack.c.bf16 %v78, %v71
    %v93 = vpack.c.bf16 %v79, %v72
    %v94 = vpack.c.bf16 %v80, %v73
    %v95 = vpack.c.bf16 %v81, %v74
    %v96 = vpack.c.bf16 %v82, %v75
    %v97 = vld [vmem:[#allocation2] sm:$0xff]
    %v98 = vld [vmem:[#allocation2 + $0x8] sm:$0xff]
    %v99 = vld [vmem:[#allocation2 + $0x10] sm:$0xff]
    %v100 = vld [vmem:[#allocation2 + $0x18] sm:$0xff]
    %v101 = vld [vmem:[#allocation2 + $0x20] sm:$0xff]
    %v102 = vld [vmem:[#allocation2 + $0x28] sm:$0xff]
    %v103 = vld [vmem:[#allocation2 + $0x30] sm:$0xff]
    %v104 = vld [vmem:[#allocation2 + $0x38] sm:$0xff]
    %v105 = vld [vmem:[#allocation2 + $0x40] sm:$0xff]
    %v106 = vld [vmem:[#allocation2 + $0x48] sm:$0xff]
    %v107 = vld [vmem:[#allocation2 + $0x50] sm:$0xff]
    %v108 = vld [vmem:[#allocation2 + $0x58] sm:$0xff]
    %v109 = vld [vmem:[#allocation2 + $0x60] sm:$0xff]
    %v110 = vld [vmem:[#allocation2 + $0x68] sm:$0xff]
    %v111 = vld [vmem:[#allocation2 + $0x70] sm:$0xff]
    %v112 = vld [vmem:[#allocation2 + $0x78] sm:$0xff]
    %v113 = vld [vmem:[#allocation2 + $0x80] sm:$0xff]
    %v114 = vld [vmem:[#allocation2 + $0x88] sm:$0xff]
    %v115 = vld [vmem:[#allocation2 + $0x90] sm:$0xff]
    %v116 = vld [vmem:[#allocation2 + $0x98] sm:$0xff]
    %v117 = vld [vmem:[#allocation2 + $0xa0] sm:$0xff]
    %v118 = vld [vmem:[#allocation2 + $0xa8] sm:$0xff]
    %v119 = vld [vmem:[#allocation2 + $0xb0] sm:$0xff]
    %v120 = vld [vmem:[#allocation2 + $0xb8] sm:$0xff]
    %v121 = vld [vmem:[#allocation2 + $0xc0] sm:$0xff]
    %v122 = vld [vmem:[#allocation2 + $0xc8] sm:$0xff]
    %v123 = vld [vmem:[#allocation2 + $0xd0] sm:$0xff]
    %v124 = vld [vmem:[#allocation2 + $0xd8] sm:$0xff]
    %v125 = vld [vmem:[#allocation2 + $0xe0] sm:$0xff]
    %v126 = vld [vmem:[#allocation2 + $0xe8] sm:$0xff]
    %v127 = vld [vmem:[#allocation2 + $0xf0] sm:$0xff]
    %v128 = vld [vmem:[#allocation2 + $0xf8] sm:$0xff]
    %v129 = vld [vmem:[#allocation2 + $0x100] sm:$0xff]
    %v130 = vld [vmem:[#allocation2 + $0x108] sm:$0xff]
    %v131 = vld [vmem:[#allocation2 + $0x110] sm:$0xff]
    %v132 = vld [vmem:[#allocation2 + $0x118] sm:$0xff]
    %v133 = vld [vmem:[#allocation2 + $0x120] sm:$0xff]
    %v134 = vld [vmem:[#allocation2 + $0x128] sm:$0xff]
    %v135 = vld [vmem:[#allocation2 + $0x130] sm:$0xff]
    %v136 = vld [vmem:[#allocation2 + $0x138] sm:$0xff]
    %v137 = vld [vmem:[#allocation2 + $0x140] sm:$0xff]
    %v138 = vld [vmem:[#allocation2 + $0x148] sm:$0xff]
    %v139 = vld [vmem:[#allocation2 + $0x150] sm:$0xff]
    %v140 = vld [vmem:[#allocation2 + $0x158] sm:$0xff]
    %v141 = vld [vmem:[#allocation2 + $0x160] sm:$0xff]
    %v142 = vld [vmem:[#allocation2 + $0x168] sm:$0xff]
    %v143 = vld [vmem:[#allocation2 + $0x170] sm:$0xff]
    %v144 = vld [vmem:[#allocation2 + $0x178] sm:$0xff]
    %v145 = vld [vmem:[#allocation2 + $0x180] sm:$0xff]
    %v146 = vld [vmem:[#allocation2 + $0x188] sm:$0xff]
    %v147 = vld [vmem:[#allocation2 + $0x190] sm:$0xff]
    %v148 = vld [vmem:[#allocation2 + $0x198] sm:$0xff]
    %v149 = vld [vmem:[#allocation2 + $0x1a0] sm:$0xff]
    %v150 = vld [vmem:[#allocation2 + $0x1a8] sm:$0xff]
    %v151 = vld [vmem:[#allocation2 + $0x1b0] sm:$0xff]
    %v152 = vld [vmem:[#allocation2 + $0x1b8] sm:$0xff]
    %v153 = vld [vmem:[#allocation2 + $0x1c0] sm:$0xff]
    %v154 = vld [vmem:[#allocation2 + $0x1c8] sm:$0xff]
    %v155 = vld [vmem:[#allocation2 + $0x1d0] sm:$0xff]
    %v156 = vld [vmem:[#allocation2 + $0x1d8] sm:$0xff]
    %v157 = vld [vmem:[#allocation2 + $0x1e0] sm:$0xff]
    %v158 = vld [vmem:[#allocation2 + $0x1e8] sm:$0xff]
    %v159 = vld [vmem:[#allocation2 + $0x1f0] sm:$0xff]
    %v160 = vld [vmem:[#allocation2 + $0x1f8] sm:$0xff]
    %v161 = vld [vmem:[#allocation2 + $0x200] sm:$0xff]
    %v162 = vld [vmem:[#allocation2 + $0x208] sm:$0xff]
    %v163 = vld [vmem:[#allocation2 + $0x210] sm:$0xff]
    %v164 = vld [vmem:[#allocation2 + $0x218] sm:$0xff]
    %v165 = vld [vmem:[#allocation2 + $0x220] sm:$0xff]
    %v166 = vld [vmem:[#allocation2 + $0x228] sm:$0xff]
    %v167 = vld [vmem:[#allocation2 + $0x230] sm:$0xff]
    %v168 = vld [vmem:[#allocation2 + $0x238] sm:$0xff]
    %v169 = vld [vmem:[#allocation2 + $0x240] sm:$0xff]
    %v170 = vld [vmem:[#allocation2 + $0x248] sm:$0xff]
    %v171 = vld [vmem:[#allocation2 + $0x250] sm:$0xff]
    %v172 = vld [vmem:[#allocation2 + $0x258] sm:$0xff]
    %v173 = vld [vmem:[#allocation2 + $0x260] sm:$0xff]
    %v174 = vld [vmem:[#allocation2 + $0x268] sm:$0xff]
    %v175 = vld [vmem:[#allocation2 + $0x270] sm:$0xff]
    %v176 = vld [vmem:[#allocation2 + $0x278] sm:$0xff]
    %v177 = vld [vmem:[#allocation2 + $0x280] sm:$0xff]
    %v178 = vld [vmem:[#allocation2 + $0x288] sm:$0xff]
    %v179 = vld [vmem:[#allocation2 + $0x290] sm:$0xff]
    %v180 = vld [vmem:[#allocation2 + $0x298] sm:$0xff]
    %v181 = vld [vmem:[#allocation2 + $0x2a0] sm:$0xff]
    %v182 = vld [vmem:[#allocation2 + $0x2a8] sm:$0xff]
    %v183 = vld [vmem:[#allocation2 + $0x2b0] sm:$0xff]
    %v184 = vld [vmem:[#allocation2 + $0x2b8] sm:$0xff]
    %v185 = vld [vmem:[#allocation2 + $0x2c0] sm:$0xff]
    %v186 = vld [vmem:[#allocation2 + $0x2c8] sm:$0xff]
    %v187 = vld [vmem:[#allocation2 + $0x2d0] sm:$0xff]
    %v188 = vld [vmem:[#allocation2 + $0x2d8] sm:$0xff]
    %v189 = vld [vmem:[#allocation2 + $0x2e0] sm:$0xff]
    %v190 = vld [vmem:[#allocation2 + $0x2e8] sm:$0xff]
    %v191 = vld [vmem:[#allocation2 + $0x2f0] sm:$0xff]
    %v192 = vld [vmem:[#allocation2 + $0x2f8] sm:$0xff]
    %v193 = vld [vmem:[#allocation2 + $0x300] sm:$0xff]
    %v194 = vld [vmem:[#allocation2 + $0x308] sm:$0xff]
    %v195 = vld [vmem:[#allocation2 + $0x310] sm:$0xff]
    %v196 = vld [vmem:[#allocation2 + $0x318] sm:$0xff]
    %v197 = vld [vmem:[#allocation2 + $0x320] sm:$0xff]
    %v198 = vld [vmem:[#allocation2 + $0x328] sm:$0xff]
    %v199 = vld [vmem:[#allocation2 + $0x330] sm:$0xff]
    %v200 = vld [vmem:[#allocation2 + $0x338] sm:$0xff]
    %v201 = vld [vmem:[#allocation2 + $0x340] sm:$0xff]
    %v202 = vld [vmem:[#allocation2 + $0x348] sm:$0xff]
    %v203 = vld [vmem:[#allocation2 + $0x350] sm:$0xff]
    %v204 = vld [vmem:[#allocation2 + $0x358] sm:$0xff]
    %v205 = vld [vmem:[#allocation2 + $0x360] sm:$0xff]
    %v206 = vld [vmem:[#allocation2 + $0x368] sm:$0xff]
    %v207 = vld [vmem:[#allocation2 + $0x370] sm:$0xff]
    %v208 = vld [vmem:[#allocation2 + $0x378] sm:$0xff]
    %v209 = vld [vmem:[#allocation2 + $0x380] sm:$0xff]
    %v210 = vld [vmem:[#allocation2 + $0x388] sm:$0xff]
    %v211 = vld [vmem:[#allocation2 + $0x390] sm:$0xff]
    %v212 = vld [vmem:[#allocation2 + $0x398] sm:$0xff]
    %v213 = vld [vmem:[#allocation2 + $0x3a0] sm:$0xff]
    %v214 = vld [vmem:[#allocation2 + $0x3a8] sm:$0xff]
    %v215 = vld [vmem:[#allocation2 + $0x3b0] sm:$0xff]
    %v216 = vld [vmem:[#allocation2 + $0x3b8] sm:$0xff]
    %v217 = vld [vmem:[#allocation2 + $0x3c0] sm:$0xff]
    %v218 = vld [vmem:[#allocation2 + $0x3c8] sm:$0xff]
    %v219 = vld [vmem:[#allocation2 + $0x3d0] sm:$0xff]
    %v220 = vld [vmem:[#allocation2 + $0x3d8] sm:$0xff]
    %v221 = vld [vmem:[#allocation2 + $0x3e0] sm:$0xff]
    %v222 = vld [vmem:[#allocation2 + $0x3e8] sm:$0xff]
    %v223 = vld [vmem:[#allocation2 + $0x3f0] sm:$0xff]
    %v224 = vld [vmem:[#allocation2 + $0x3f8] sm:$0xff]
    %v225 = vld [vmem:[#allocation2 + $0x400] sm:$0xff]
    %v226 = vld [vmem:[#allocation2 + $0x408] sm:$0xff]
    %v227 = vld [vmem:[#allocation2 + $0x410] sm:$0xff]
    %v228 = vld [vmem:[#allocation2 + $0x418] sm:$0xff]
    %v229 = vld [vmem:[#allocation2 + $0x420] sm:$0xff]
    %v230 = vld [vmem:[#allocation2 + $0x428] sm:$0xff]
    %v231 = vld [vmem:[#allocation2 + $0x430] sm:$0xff]
    %v232 = vld [vmem:[#allocation2 + $0x438] sm:$0xff]
    %v233 = vld [vmem:[#allocation2 + $0x440] sm:$0xff]
    %v234 = vld [vmem:[#allocation2 + $0x448] sm:$0xff]
    %v235 = vld [vmem:[#allocation2 + $0x450] sm:$0xff]
    %v236 = vld [vmem:[#allocation2 + $0x458] sm:$0xff]
    %v237 = vld [vmem:[#allocation2 + $0x460] sm:$0xff]
    %v238 = vld [vmem:[#allocation2 + $0x468] sm:$0xff]
    %v239 = vld [vmem:[#allocation2 + $0x470] sm:$0xff]
    %v240 = vld [vmem:[#allocation2 + $0x478] sm:$0xff]
    %v241 = vld [vmem:[#allocation2 + $0x480] sm:$0xff]
    %v242 = vld [vmem:[#allocation2 + $0x488] sm:$0xff]
    %v243 = vld [vmem:[#allocation2 + $0x490] sm:$0xff]
    %v244 = vld [vmem:[#allocation2 + $0x498] sm:$0xff]
    %v245 = vld [vmem:[#allocation2 + $0x4a0] sm:$0xff]
    %v246 = vld [vmem:[#allocation2 + $0x4a8] sm:$0xff]
    %v247 = vld [vmem:[#allocation2 + $0x4b0] sm:$0xff]
    %v248 = vld [vmem:[#allocation2 + $0x4b8] sm:$0xff]
    %v249 = vld [vmem:[#allocation2 + $0x4c0] sm:$0xff]
    %v250 = vld [vmem:[#allocation2 + $0x4c8] sm:$0xff]
    %v251 = vld [vmem:[#allocation2 + $0x4d0] sm:$0xff]
    %v252 = vld [vmem:[#allocation2 + $0x4d8] sm:$0xff]
    %v253 = vld [vmem:[#allocation2 + $0x4e0] sm:$0xff]
    %v254 = vld [vmem:[#allocation2 + $0x4e8] sm:$0xff]
    %v255 = vld [vmem:[#allocation2 + $0x4f0] sm:$0xff]
    %v256 = vld [vmem:[#allocation2 + $0x4f8] sm:$0xff]
    %v257 = vld [vmem:[#allocation2 + $0x500] sm:$0xff]
    %v258 = vld [vmem:[#allocation2 + $0x508] sm:$0xff]
    %v259 = vld [vmem:[#allocation2 + $0x510] sm:$0xff]
    %v260 = vld [vmem:[#allocation2 + $0x518] sm:$0xff]
    %v261 = vld [vmem:[#allocation2 + $0x520] sm:$0xff]
    %v262 = vld [vmem:[#allocation2 + $0x528] sm:$0xff]
    %v263 = vld [vmem:[#allocation2 + $0x530] sm:$0xff]
    %v264 = vld [vmem:[#allocation2 + $0x538] sm:$0xff]
    %v265 = vld [vmem:[#allocation2 + $0x540] sm:$0xff]
    %v266 = vld [vmem:[#allocation2 + $0x548] sm:$0xff]
    %v267 = vld [vmem:[#allocation2 + $0x550] sm:$0xff]
    %v268 = vld [vmem:[#allocation2 + $0x558] sm:$0xff]
    %v269 = vld [vmem:[#allocation2 + $0x560] sm:$0xff]
    %v270 = vld [vmem:[#allocation2 + $0x568] sm:$0xff]
    %v271 = vld [vmem:[#allocation2 + $0x570] sm:$0xff]
    %v272 = vld [vmem:[#allocation2 + $0x578] sm:$0xff]
    %v273 = vld [vmem:[#allocation2 + $0x580] sm:$0xff]
    %v274 = vld [vmem:[#allocation2 + $0x588] sm:$0xff]
    %v275 = vld [vmem:[#allocation2 + $0x590] sm:$0xff]
    %v276 = vld [vmem:[#allocation2 + $0x598] sm:$0xff]
    %v277 = vld [vmem:[#allocation2 + $0x5a0] sm:$0xff]
    %v278 = vld [vmem:[#allocation2 + $0x5a8] sm:$0xff]
    %v279 = vld [vmem:[#allocation2 + $0x5b0] sm:$0xff]
    %v280 = vld [vmem:[#allocation2 + $0x5b8] sm:$0xff]
    %v281 = vld [vmem:[#allocation2 + $0x5c0] sm:$0xff]
    %v282 = vld [vmem:[#allocation2 + $0x5c8] sm:$0xff]
    %v283 = vld [vmem:[#allocation2 + $0x5d0] sm:$0xff]
    %v284 = vld [vmem:[#allocation2 + $0x5d8] sm:$0xff]
    %v285 = vld [vmem:[#allocation2 + $0x5e0] sm:$0xff]
    %v286 = vld [vmem:[#allocation2 + $0x5e8] sm:$0xff]
    %v287 = vld [vmem:[#allocation2 + $0x5f0] sm:$0xff]
    %v288 = vld [vmem:[#allocation2 + $0x5f8] sm:$0xff]
    %v289 = vld [vmem:[#allocation2 + $0x600] sm:$0xff]
    %v290 = vld [vmem:[#allocation2 + $0x608] sm:$0xff]
    %v291 = vld [vmem:[#allocation2 + $0x610] sm:$0xff]
    %v292 = vld [vmem:[#allocation2 + $0x618] sm:$0xff]
    %v293 = vld [vmem:[%s2] sm:$0xf]
    %v295 = vlaneseq
    %v296 = vshrl.u32 %v295, 7
    %v297 = vsub.s32 0, %v296
    %v298 = vrot.slane %v293, %v297
    %v299 = vlaneseq
    %v300 = vshrl.u32 %v299, 7
    %v301 = vsub.s32 1, %v300
    %v302 = vrot.slane %v293, %v301
    %v303 = vlaneseq
    %v304 = vshrl.u32 %v303, 7
    %v305 = vsub.s32 2, %v304
    %v306 = vrot.slane %v293, %v305
    %v307 = vlaneseq
    %v308 = vshrl.u32 %v307, 7
    %v309 = vsub.s32 3, %v308
    %v310 = vrot.slane %v293, %v309
    %v511 = vunpack.c.l.b16 %v97
    %v512 = vunpack.c.h.b16 %v97
    %v513 = vunpack.c.l.b16 %v98
    %v514 = vunpack.c.h.b16 %v98
    %v515 = vunpack.c.l.b16 %v99
    %v516 = vunpack.c.h.b16 %v99
    %v517 = vunpack.c.l.b16 %v100
    %v518 = vunpack.c.h.b16 %v100
    %v519 = vunpack.c.l.b16 %v101
    %v520 = vunpack.c.h.b16 %v101
    %v521 = vunpack.c.l.b16 %v102
    %v522 = vunpack.c.h.b16 %v102
    %v523 = vunpack.c.l.b16 %v103
    %v524 = vunpack.c.h.b16 %v103
    %v525 = vunpack.c.l.b16 %v104
    %v526 = vunpack.c.h.b16 %v104
    %v527 = vunpack.c.l.b16 %v105
    %v528 = vunpack.c.h.b16 %v105
    %v529 = vunpack.c.l.b16 %v106
    %v530 = vunpack.c.h.b16 %v106
    %v531 = vunpack.c.l.b16 %v107
    %v532 = vunpack.c.h.b16 %v107
    %v533 = vunpack.c.l.b16 %v108
    %v534 = vunpack.c.h.b16 %v108
    %v535 = vunpack.c.l.b16 %v109
    %v536 = vunpack.c.h.b16 %v109
    %v537 = vunpack.c.l.b16 %v110
    %v538 = vunpack.c.h.b16 %v110
    %v539 = vunpack.c.l.b16 %v111
    %v540 = vunpack.c.h.b16 %v111
    %v541 = vunpack.c.l.b16 %v112
    %v542 = vunpack.c.h.b16 %v112
    %v543 = vunpack.c.l.b16 %v113
    %v544 = vunpack.c.h.b16 %v113
    %v545 = vunpack.c.l.b16 %v114
    %v546 = vunpack.c.h.b16 %v114
    %v547 = vunpack.c.l.b16 %v115
    %v548 = vunpack.c.h.b16 %v115
    %v549 = vunpack.c.l.b16 %v116
    %v550 = vunpack.c.h.b16 %v116
    %v551 = vunpack.c.l.b16 %v117
    %v552 = vunpack.c.h.b16 %v117
    %v553 = vunpack.c.l.b16 %v118
    %v554 = vunpack.c.h.b16 %v118
    %v555 = vunpack.c.l.b16 %v119
    %v556 = vunpack.c.h.b16 %v119
    %v557 = vunpack.c.l.b16 %v120
    %v558 = vunpack.c.h.b16 %v120
    %v559 = vunpack.c.l.b16 %v121
    %v560 = vunpack.c.h.b16 %v121
    %v561 = vunpack.c.l.b16 %v122
    %v562 = vunpack.c.h.b16 %v122
    %v563 = vunpack.c.l.b16 %v123
    %v564 = vunpack.c.h.b16 %v123
    %v565 = vunpack.c.l.b16 %v124
    %v566 = vunpack.c.h.b16 %v124
    %v567 = vunpack.c.l.b16 %v125
    %v568 = vunpack.c.h.b16 %v125
    %v569 = vunpack.c.l.b16 %v126
    %v570 = vunpack.c.h.b16 %v126
    %v571 = vunpack.c.l.b16 %v127
    %v572 = vunpack.c.h.b16 %v127
    %v573 = vunpack.c.l.b16 %v128
    %v574 = vunpack.c.h.b16 %v128
    %v575 = vunpack.c.l.b16 %v129
    %v576 = vunpack.c.h.b16 %v129
    %v577 = vunpack.c.l.b16 %v130
    %v578 = vunpack.c.h.b16 %v130
    %v579 = vunpack.c.l.b16 %v131
    %v580 = vunpack.c.h.b16 %v131
    %v581 = vunpack.c.l.b16 %v132
    %v582 = vunpack.c.h.b16 %v132
    %v583 = vunpack.c.l.b16 %v133
    %v584 = vunpack.c.h.b16 %v133
    %v585 = vunpack.c.l.b16 %v134
    %v586 = vunpack.c.h.b16 %v134
    %v587 = vunpack.c.l.b16 %v135
    %v588 = vunpack.c.h.b16 %v135
    %v589 = vunpack.c.l.b16 %v136
    %v590 = vunpack.c.h.b16 %v136
    %v591 = vunpack.c.l.b16 %v137
    %v592 = vunpack.c.h.b16 %v137
    %v593 = vunpack.c.l.b16 %v138
    %v594 = vunpack.c.h.b16 %v138
    %v595 = vunpack.c.l.b16 %v139
    %v596 = vunpack.c.h.b16 %v139
    %v597 = vunpack.c.l.b16 %v140
    %v598 = vunpack.c.h.b16 %v140
    %v599 = vunpack.c.l.b16 %v141
    %v600 = vunpack.c.h.b16 %v141
    %v601 = vunpack.c.l.b16 %v142
    %v602 = vunpack.c.h.b16 %v142
    %v603 = vunpack.c.l.b16 %v143
    %v604 = vunpack.c.h.b16 %v143
    %v605 = vunpack.c.l.b16 %v144
    %v606 = vunpack.c.h.b16 %v144
    %v607 = vunpack.c.l.b16 %v145
    %v608 = vunpack.c.h.b16 %v145
    %v609 = vunpack.c.l.b16 %v146
    %v610 = vunpack.c.h.b16 %v146
    %v611 = vunpack.c.l.b16 %v147
    %v612 = vunpack.c.h.b16 %v147
    %v613 = vunpack.c.l.b16 %v148
    %v614 = vunpack.c.h.b16 %v148
    %v615 = vunpack.c.l.b16 %v149
    %v616 = vunpack.c.h.b16 %v149
    %v617 = vunpack.c.l.b16 %v150
    %v618 = vunpack.c.h.b16 %v150
    %v619 = vunpack.c.l.b16 %v151
    %v620 = vunpack.c.h.b16 %v151
    %v621 = vunpack.c.l.b16 %v152
    %v622 = vunpack.c.h.b16 %v152
    %v623 = vunpack.c.l.b16 %v153
    %v624 = vunpack.c.h.b16 %v153
    %v625 = vunpack.c.l.b16 %v154
    %v626 = vunpack.c.h.b16 %v154
    %v627 = vunpack.c.l.b16 %v155
    %v628 = vunpack.c.h.b16 %v155
    %v629 = vunpack.c.l.b16 %v156
    %v630 = vunpack.c.h.b16 %v156
    %v631 = vunpack.c.l.b16 %v157
    %v632 = vunpack.c.h.b16 %v157
    %v633 = vunpack.c.l.b16 %v158
    %v634 = vunpack.c.h.b16 %v158
    %v635 = vunpack.c.l.b16 %v159
    %v636 = vunpack.c.h.b16 %v159
    %v637 = vunpack.c.l.b16 %v160
    %v638 = vunpack.c.h.b16 %v160
    %v639 = vunpack.c.l.b16 %v161
    %v640 = vunpack.c.h.b16 %v161
    %v641 = vunpack.c.l.b16 %v162
    %v642 = vunpack.c.h.b16 %v162
    %v643 = vunpack.c.l.b16 %v163
    %v644 = vunpack.c.h.b16 %v163
    %v645 = vunpack.c.l.b16 %v164
    %v646 = vunpack.c.h.b16 %v164
    %v647 = vunpack.c.l.b16 %v165
    %v648 = vunpack.c.h.b16 %v165
    %v649 = vunpack.c.l.b16 %v166
    %v650 = vunpack.c.h.b16 %v166
    %v651 = vunpack.c.l.b16 %v167
    %v652 = vunpack.c.h.b16 %v167
    %v653 = vunpack.c.l.b16 %v168
    %v654 = vunpack.c.h.b16 %v168
    %v655 = vunpack.c.l.b16 %v169
    %v656 = vunpack.c.h.b16 %v169
    %v657 = vunpack.c.l.b16 %v170
    %v658 = vunpack.c.h.b16 %v170
    %v659 = vunpack.c.l.b16 %v171
    %v660 = vunpack.c.h.b16 %v171
    %v661 = vunpack.c.l.b16 %v172
    %v662 = vunpack.c.h.b16 %v172
    %v663 = vunpack.c.l.b16 %v173
    %v664 = vunpack.c.h.b16 %v173
    %v665 = vunpack.c.l.b16 %v174
    %v666 = vunpack.c.h.b16 %v174
    %v667 = vunpack.c.l.b16 %v175
    %v668 = vunpack.c.h.b16 %v175
    %v669 = vunpack.c.l.b16 %v176
    %v670 = vunpack.c.h.b16 %v176
    %v671 = vunpack.c.l.b16 %v177
    %v672 = vunpack.c.h.b16 %v177
    %v673 = vunpack.c.l.b16 %v178
    %v674 = vunpack.c.h.b16 %v178
    %v675 = vunpack.c.l.b16 %v179
    %v676 = vunpack.c.h.b16 %v179
    %v677 = vunpack.c.l.b16 %v180
    %v678 = vunpack.c.h.b16 %v180
    %v679 = vunpack.c.l.b16 %v181
    %v680 = vunpack.c.h.b16 %v181
    %v681 = vunpack.c.l.b16 %v182
    %v682 = vunpack.c.h.b16 %v182
    %v683 = vunpack.c.l.b16 %v183
    %v684 = vunpack.c.h.b16 %v183
    %v685 = vunpack.c.l.b16 %v184
    %v686 = vunpack.c.h.b16 %v184
    %v687 = vunpack.c.l.b16 %v185
    %v688 = vunpack.c.h.b16 %v185
    %v689 = vunpack.c.l.b16 %v186
    %v690 = vunpack.c.h.b16 %v186
    %v691 = vunpack.c.l.b16 %v187
    %v692 = vunpack.c.h.b16 %v187
    %v693 = vunpack.c.l.b16 %v188
    %v694 = vunpack.c.h.b16 %v188
    %v695 = vunpack.c.l.b16 %v189
    %v696 = vunpack.c.h.b16 %v189
    %v697 = vunpack.c.l.b16 %v190
    %v698 = vunpack.c.h.b16 %v190
    %v699 = vunpack.c.l.b16 %v191
    %v700 = vunpack.c.h.b16 %v191
    %v701 = vunpack.c.l.b16 %v192
    %v702 = vunpack.c.h.b16 %v192
    %v703 = vunpack.c.l.b16 %v193
    %v704 = vunpack.c.h.b16 %v193
    %v705 = vunpack.c.l.b16 %v194
    %v706 = vunpack.c.h.b16 %v194
    %v707 = vunpack.c.l.b16 %v195
    %v708 = vunpack.c.h.b16 %v195
    %v709 = vunpack.c.l.b16 %v196
    %v710 = vunpack.c.h.b16 %v196
    %v711 = vunpack.c.l.b16 %v197
    %v712 = vunpack.c.h.b16 %v197
    %v713 = vunpack.c.l.b16 %v198
    %v714 = vunpack.c.h.b16 %v198
    %v715 = vunpack.c.l.b16 %v199
    %v716 = vunpack.c.h.b16 %v199
    %v717 = vunpack.c.l.b16 %v200
    %v718 = vunpack.c.h.b16 %v200
    %v719 = vunpack.c.l.b16 %v201
    %v720 = vunpack.c.h.b16 %v201
    %v721 = vunpack.c.l.b16 %v202
    %v722 = vunpack.c.h.b16 %v202
    %v723 = vunpack.c.l.b16 %v203
    %v724 = vunpack.c.h.b16 %v203
    %v725 = vunpack.c.l.b16 %v204
    %v726 = vunpack.c.h.b16 %v204
    %v727 = vunpack.c.l.b16 %v205
    %v728 = vunpack.c.h.b16 %v205
    %v729 = vunpack.c.l.b16 %v206
    %v730 = vunpack.c.h.b16 %v206
    %v731 = vunpack.c.l.b16 %v207
    %v732 = vunpack.c.h.b16 %v207
    %v733 = vunpack.c.l.b16 %v208
    %v734 = vunpack.c.h.b16 %v208
    %v735 = vunpack.c.l.b16 %v209
    %v736 = vunpack.c.h.b16 %v209
    %v737 = vunpack.c.l.b16 %v210
    %v738 = vunpack.c.h.b16 %v210
    %v739 = vunpack.c.l.b16 %v211
    %v740 = vunpack.c.h.b16 %v211
    %v741 = vunpack.c.l.b16 %v212
    %v742 = vunpack.c.h.b16 %v212
    %v743 = vunpack.c.l.b16 %v213
    %v744 = vunpack.c.h.b16 %v213
    %v745 = vunpack.c.l.b16 %v214
    %v746 = vunpack.c.h.b16 %v214
    %v747 = vunpack.c.l.b16 %v215
    %v748 = vunpack.c.h.b16 %v215
    %v749 = vunpack.c.l.b16 %v216
    %v750 = vunpack.c.h.b16 %v216
    %v751 = vunpack.c.l.b16 %v217
    %v752 = vunpack.c.h.b16 %v217
    %v753 = vunpack.c.l.b16 %v218
    %v754 = vunpack.c.h.b16 %v218
    %v755 = vunpack.c.l.b16 %v219
    %v756 = vunpack.c.h.b16 %v219
    %v757 = vunpack.c.l.b16 %v220
    %v758 = vunpack.c.h.b16 %v220
    %v759 = vunpack.c.l.b16 %v221
    %v760 = vunpack.c.h.b16 %v221
    %v761 = vunpack.c.l.b16 %v222
    %v762 = vunpack.c.h.b16 %v222
    %v763 = vunpack.c.l.b16 %v223
    %v764 = vunpack.c.h.b16 %v223
    %v765 = vunpack.c.l.b16 %v224
    %v766 = vunpack.c.h.b16 %v224
    %v767 = vunpack.c.l.b16 %v225
    %v768 = vunpack.c.h.b16 %v225
    %v769 = vunpack.c.l.b16 %v226
    %v770 = vunpack.c.h.b16 %v226
    %v771 = vunpack.c.l.b16 %v227
    %v772 = vunpack.c.h.b16 %v227
    %v773 = vunpack.c.l.b16 %v228
    %v774 = vunpack.c.h.b16 %v228
    %v775 = vunpack.c.l.b16 %v229
    %v776 = vunpack.c.h.b16 %v229
    %v777 = vunpack.c.l.b16 %v230
    %v778 = vunpack.c.h.b16 %v230
    %v779 = vunpack.c.l.b16 %v231
    %v780 = vunpack.c.h.b16 %v231
    %v781 = vunpack.c.l.b16 %v232
    %v782 = vunpack.c.h.b16 %v232
    %v783 = vunpack.c.l.b16 %v233
    %v784 = vunpack.c.h.b16 %v233
    %v785 = vunpack.c.l.b16 %v234
    %v786 = vunpack.c.h.b16 %v234
    %v787 = vunpack.c.l.b16 %v235
    %v788 = vunpack.c.h.b16 %v235
    %v789 = vunpack.c.l.b16 %v236
    %v790 = vunpack.c.h.b16 %v236
    %v791 = vunpack.c.l.b16 %v237
    %v792 = vunpack.c.h.b16 %v237
    %v793 = vunpack.c.l.b16 %v238
    %v794 = vunpack.c.h.b16 %v238
    %v795 = vunpack.c.l.b16 %v239
    %v796 = vunpack.c.h.b16 %v239
    %v797 = vunpack.c.l.b16 %v240
    %v798 = vunpack.c.h.b16 %v240
    %v799 = vunpack.c.l.b16 %v241
    %v800 = vunpack.c.h.b16 %v241
    %v801 = vunpack.c.l.b16 %v242
    %v802 = vunpack.c.h.b16 %v242
    %v803 = vunpack.c.l.b16 %v243
    %v804 = vunpack.c.h.b16 %v243
    %v805 = vunpack.c.l.b16 %v244
    %v806 = vunpack.c.h.b16 %v244
    %v807 = vunpack.c.l.b16 %v245
    %v808 = vunpack.c.h.b16 %v245
    %v809 = vunpack.c.l.b16 %v246
    %v810 = vunpack.c.h.b16 %v246
    %v811 = vunpack.c.l.b16 %v247
    %v812 = vunpack.c.h.b16 %v247
    %v813 = vunpack.c.l.b16 %v248
    %v814 = vunpack.c.h.b16 %v248
    %v815 = vunpack.c.l.b16 %v249
    %v816 = vunpack.c.h.b16 %v249
    %v817 = vunpack.c.l.b16 %v250
    %v818 = vunpack.c.h.b16 %v250
    %v819 = vunpack.c.l.b16 %v251
    %v820 = vunpack.c.h.b16 %v251
    %v821 = vunpack.c.l.b16 %v252
    %v822 = vunpack.c.h.b16 %v252
    %v823 = vunpack.c.l.b16 %v253
    %v824 = vunpack.c.h.b16 %v253
    %v825 = vunpack.c.l.b16 %v254
    %v826 = vunpack.c.h.b16 %v254
    %v827 = vunpack.c.l.b16 %v255
    %v828 = vunpack.c.h.b16 %v255
    %v829 = vunpack.c.l.b16 %v256
    %v830 = vunpack.c.h.b16 %v256
    %v831 = vunpack.c.l.b16 %v257
    %v832 = vunpack.c.h.b16 %v257
    %v833 = vunpack.c.l.b16 %v258
    %v834 = vunpack.c.h.b16 %v258
    %v835 = vunpack.c.l.b16 %v259
    %v836 = vunpack.c.h.b16 %v259
    %v837 = vunpack.c.l.b16 %v260
    %v838 = vunpack.c.h.b16 %v260
    %v839 = vunpack.c.l.b16 %v261
    %v840 = vunpack.c.h.b16 %v261
    %v841 = vunpack.c.l.b16 %v262
    %v842 = vunpack.c.h.b16 %v262
    %v843 = vunpack.c.l.b16 %v263
    %v844 = vunpack.c.h.b16 %v263
    %v845 = vunpack.c.l.b16 %v264
    %v846 = vunpack.c.h.b16 %v264
    %v847 = vunpack.c.l.b16 %v265
    %v848 = vunpack.c.h.b16 %v265
    %v849 = vunpack.c.l.b16 %v266
    %v850 = vunpack.c.h.b16 %v266
    %v851 = vunpack.c.l.b16 %v267
    %v852 = vunpack.c.h.b16 %v267
    %v853 = vunpack.c.l.b16 %v268
    %v854 = vunpack.c.h.b16 %v268
    %v855 = vunpack.c.l.b16 %v269
    %v856 = vunpack.c.h.b16 %v269
    %v857 = vunpack.c.l.b16 %v270
    %v858 = vunpack.c.h.b16 %v270
    %v859 = vunpack.c.l.b16 %v271
    %v860 = vunpack.c.h.b16 %v271
    %v861 = vunpack.c.l.b16 %v272
    %v862 = vunpack.c.h.b16 %v272
    %v863 = vunpack.c.l.b16 %v273
    %v864 = vunpack.c.h.b16 %v273
    %v865 = vunpack.c.l.b16 %v274
    %v866 = vunpack.c.h.b16 %v274
    %v867 = vunpack.c.l.b16 %v275
    %v868 = vunpack.c.h.b16 %v275
    %v869 = vunpack.c.l.b16 %v276
    %v870 = vunpack.c.h.b16 %v276
    %v871 = vunpack.c.l.b16 %v277
    %v872 = vunpack.c.h.b16 %v277
    %v873 = vunpack.c.l.b16 %v278
    %v874 = vunpack.c.h.b16 %v278
    %v875 = vunpack.c.l.b16 %v279
    %v876 = vunpack.c.h.b16 %v279
    %v877 = vunpack.c.l.b16 %v280
    %v878 = vunpack.c.h.b16 %v280
    %v879 = vunpack.c.l.b16 %v281
    %v880 = vunpack.c.h.b16 %v281
    %v881 = vunpack.c.l.b16 %v282
    %v882 = vunpack.c.h.b16 %v282
    %v883 = vunpack.c.l.b16 %v283
    %v884 = vunpack.c.h.b16 %v283
    %v885 = vunpack.c.l.b16 %v284
    %v886 = vunpack.c.h.b16 %v284
    %v887 = vunpack.c.l.b16 %v285
    %v888 = vunpack.c.h.b16 %v285
    %v889 = vunpack.c.l.b16 %v286
    %v890 = vunpack.c.h.b16 %v286
    %v891 = vunpack.c.l.b16 %v287
    %v892 = vunpack.c.h.b16 %v287
    %v893 = vunpack.c.l.b16 %v288
    %v894 = vunpack.c.h.b16 %v288
    %v895 = vunpack.c.l.b16 %v289
    %v896 = vunpack.c.h.b16 %v289
    %v897 = vunpack.c.l.b16 %v290
    %v898 = vunpack.c.h.b16 %v290
    %v899 = vunpack.c.l.b16 %v291
    %v900 = vunpack.c.h.b16 %v291
    %v901 = vunpack.c.l.b16 %v292
    %v902 = vunpack.c.h.b16 %v292
    %v903 = vpack.c.b16 %v515, %v511
    %v904 = vpack.c.b16 %v516, %v512
    %v905 = vpack.c.b16 %v517, %v513
    %v906 = vpack.c.b16 %v518, %v514
    %v907 = vpack.c.b16 %v523, %v519
    %v908 = vpack.c.b16 %v524, %v520
    %v909 = vpack.c.b16 %v525, %v521
    %v910 = vpack.c.b16 %v526, %v522
    %v911 = vpack.c.b16 %v531, %v527
    %v912 = vpack.c.b16 %v532, %v528
    %v913 = vpack.c.b16 %v533, %v529
    %v914 = vpack.c.b16 %v534, %v530
    %v915 = vpack.c.b16 %v539, %v535
    %v916 = vpack.c.b16 %v540, %v536
    %v917 = vpack.c.b16 %v541, %v537
    %v918 = vpack.c.b16 %v542, %v538
    %v919 = vpack.c.b16 %v547, %v543
    %v920 = vpack.c.b16 %v548, %v544
    %v921 = vpack.c.b16 %v549, %v545
    %v922 = vpack.c.b16 %v550, %v546
    %v923 = vpack.c.b16 %v555, %v551
    %v924 = vpack.c.b16 %v556, %v552
    %v925 = vpack.c.b16 %v557, %v553
    %v926 = vpack.c.b16 %v558, %v554
    %v927 = vpack.c.b16 %v563, %v559
    %v928 = vpack.c.b16 %v564, %v560
    %v929 = vpack.c.b16 %v565, %v561
    %v930 = vpack.c.b16 %v566, %v562
    %v931 = vpack.c.b16 %v571, %v567
    %v932 = vpack.c.b16 %v572, %v568
    %v933 = vpack.c.b16 %v573, %v569
    %v934 = vpack.c.b16 %v574, %v570
    %v935 = vpack.c.b16 %v579, %v575
    %v936 = vpack.c.b16 %v580, %v576
    %v937 = vpack.c.b16 %v581, %v577
    %v938 = vpack.c.b16 %v582, %v578
    %v939 = vpack.c.b16 %v587, %v583
    %v940 = vpack.c.b16 %v588, %v584
    %v941 = vpack.c.b16 %v589, %v585
    %v942 = vpack.c.b16 %v590, %v586
    %v943 = vpack.c.b16 %v595, %v591
    %v944 = vpack.c.b16 %v596, %v592
    %v945 = vpack.c.b16 %v597, %v593
    %v946 = vpack.c.b16 %v598, %v594
    %v947 = vpack.c.b16 %v603, %v599
    %v948 = vpack.c.b16 %v604, %v600
    %v949 = vpack.c.b16 %v605, %v601
    %v950 = vpack.c.b16 %v606, %v602
    %v951 = vpack.c.b16 %v611, %v607
    %v952 = vpack.c.b16 %v612, %v608
    %v953 = vpack.c.b16 %v613, %v609
    %v954 = vpack.c.b16 %v614, %v610
    %v955 = vpack.c.b16 %v619, %v615
    %v956 = vpack.c.b16 %v620, %v616
    %v957 = vpack.c.b16 %v621, %v617
    %v958 = vpack.c.b16 %v622, %v618
    %v959 = vpack.c.b16 %v627, %v623
    %v960 = vpack.c.b16 %v628, %v624
    %v961 = vpack.c.b16 %v629, %v625
    %v962 = vpack.c.b16 %v630, %v626
    %v963 = vpack.c.b16 %v635, %v631
    %v964 = vpack.c.b16 %v636, %v632
    %v965 = vpack.c.b16 %v637, %v633
    %v966 = vpack.c.b16 %v638, %v634
    %v967 = vpack.c.b16 %v643, %v639
    %v968 = vpack.c.b16 %v644, %v640
    %v969 = vpack.c.b16 %v645, %v641
    %v970 = vpack.c.b16 %v646, %v642
    %v971 = vpack.c.b16 %v651, %v647
    %v972 = vpack.c.b16 %v652, %v648
    %v973 = vpack.c.b16 %v653, %v649
    %v974 = vpack.c.b16 %v654, %v650
    %v975 = vpack.c.b16 %v659, %v655
    %v976 = vpack.c.b16 %v660, %v656
    %v977 = vpack.c.b16 %v661, %v657
    %v978 = vpack.c.b16 %v662, %v658
    %v979 = vpack.c.b16 %v667, %v663
    %v980 = vpack.c.b16 %v668, %v664
    %v981 = vpack.c.b16 %v669, %v665
    %v982 = vpack.c.b16 %v670, %v666
    %v983 = vpack.c.b16 %v675, %v671
    %v984 = vpack.c.b16 %v676, %v672
    %v985 = vpack.c.b16 %v677, %v673
    %v986 = vpack.c.b16 %v678, %v674
    %v987 = vpack.c.b16 %v683, %v679
    %v988 = vpack.c.b16 %v684, %v680
    %v989 = vpack.c.b16 %v685, %v681
    %v990 = vpack.c.b16 %v686, %v682
    %v991 = vpack.c.b16 %v691, %v687
    %v992 = vpack.c.b16 %v692, %v688
    %v993 = vpack.c.b16 %v693, %v689
    %v994 = vpack.c.b16 %v694, %v690
    %v995 = vpack.c.b16 %v699, %v695
    %v996 = vpack.c.b16 %v700, %v696
    %v997 = vpack.c.b16 %v701, %v697
    %v998 = vpack.c.b16 %v702, %v698
    %v999 = vpack.c.b16 %v707, %v703
    %v1000 = vpack.c.b16 %v708, %v704
    %v1001 = vpack.c.b16 %v709, %v705
    %v1002 = vpack.c.b16 %v710, %v706
    %v1003 = vpack.c.b16 %v715, %v711
    %v1004 = vpack.c.b16 %v716, %v712
    %v1005 = vpack.c.b16 %v717, %v713
    %v1006 = vpack.c.b16 %v718, %v714
    %v1007 = vpack.c.b16 %v723, %v719
    %v1008 = vpack.c.b16 %v724, %v720
    %v1009 = vpack.c.b16 %v725, %v721
    %v1010 = vpack.c.b16 %v726, %v722
    %v1011 = vpack.c.b16 %v731, %v727
    %v1012 = vpack.c.b16 %v732, %v728
    %v1013 = vpack.c.b16 %v733, %v729
    %v1014 = vpack.c.b16 %v734, %v730
    %v1015 = vpack.c.b16 %v739, %v735
    %v1016 = vpack.c.b16 %v740, %v736
    %v1017 = vpack.c.b16 %v741, %v737
    %v1018 = vpack.c.b16 %v742, %v738
    %v1019 = vpack.c.b16 %v747, %v743
    %v1020 = vpack.c.b16 %v748, %v744
    %v1021 = vpack.c.b16 %v749, %v745
    %v1022 = vpack.c.b16 %v750, %v746
    %v1023 = vpack.c.b16 %v755, %v751
    %v1024 = vpack.c.b16 %v756, %v752
    %v1025 = vpack.c.b16 %v757, %v753
    %v1026 = vpack.c.b16 %v758, %v754
    %v1027 = vpack.c.b16 %v763, %v759
    %v1028 = vpack.c.b16 %v764, %v760
    %v1029 = vpack.c.b16 %v765, %v761
    %v1030 = vpack.c.b16 %v766, %v762
    %v1031 = vpack.c.b16 %v771, %v767
    %v1032 = vpack.c.b16 %v772, %v768
    %v1033 = vpack.c.b16 %v773, %v769
    %v1034 = vpack.c.b16 %v774, %v770
    %v1035 = vpack.c.b16 %v779, %v775
    %v1036 = vpack.c.b16 %v780, %v776
    %v1037 = vpack.c.b16 %v781, %v777
    %v1038 = vpack.c.b16 %v782, %v778
    %v1039 = vpack.c.b16 %v787, %v783
    %v1040 = vpack.c.b16 %v788, %v784
    %v1041 = vpack.c.b16 %v789, %v785
    %v1042 = vpack.c.b16 %v790, %v786
    %v1043 = vpack.c.b16 %v795, %v791
    %v1044 = vpack.c.b16 %v796, %v792
    %v1045 = vpack.c.b16 %v797, %v793
    %v1046 = vpack.c.b16 %v798, %v794
    %v1047 = vpack.c.b16 %v803, %v799
    %v1048 = vpack.c.b16 %v804, %v800
    %v1049 = vpack.c.b16 %v805, %v801
    %v1050 = vpack.c.b16 %v806, %v802
    %v1051 = vpack.c.b16 %v811, %v807
    %v1052 = vpack.c.b16 %v812, %v808
    %v1053 = vpack.c.b16 %v813, %v809
    %v1054 = vpack.c.b16 %v814, %v810
    %v1055 = vpack.c.b16 %v819, %v815
    %v1056 = vpack.c.b16 %v820, %v816
    %v1057 = vpack.c.b16 %v821, %v817
    %v1058 = vpack.c.b16 %v822, %v818
    %v1059 = vpack.c.b16 %v827, %v823
    %v1060 = vpack.c.b16 %v828, %v824
    %v1061 = vpack.c.b16 %v829, %v825
    %v1062 = vpack.c.b16 %v830, %v826
    %v1063 = vpack.c.b16 %v835, %v831
    %v1064 = vpack.c.b16 %v836, %v832
    %v1065 = vpack.c.b16 %v837, %v833
    %v1066 = vpack.c.b16 %v838, %v834
    %v1067 = vpack.c.b16 %v843, %v839
    %v1068 = vpack.c.b16 %v844, %v840
    %v1069 = vpack.c.b16 %v845, %v841
    %v1070 = vpack.c.b16 %v846, %v842
    %v1071 = vpack.c.b16 %v851, %v847
    %v1072 = vpack.c.b16 %v852, %v848
    %v1073 = vpack.c.b16 %v853, %v849
    %v1074 = vpack.c.b16 %v854, %v850
    %v1075 = vpack.c.b16 %v859, %v855
    %v1076 = vpack.c.b16 %v860, %v856
    %v1077 = vpack.c.b16 %v861, %v857
    %v1078 = vpack.c.b16 %v862, %v858
    %v1079 = vpack.c.b16 %v867, %v863
    %v1080 = vpack.c.b16 %v868, %v864
    %v1081 = vpack.c.b16 %v869, %v865
    %v1082 = vpack.c.b16 %v870, %v866
    %v1083 = vpack.c.b16 %v875, %v871
    %v1084 = vpack.c.b16 %v876, %v872
    %v1085 = vpack.c.b16 %v877, %v873
    %v1086 = vpack.c.b16 %v878, %v874
    %v1087 = vpack.c.b16 %v883, %v879
    %v1088 = vpack.c.b16 %v884, %v880
    %v1089 = vpack.c.b16 %v885, %v881
    %v1090 = vpack.c.b16 %v886, %v882
    %v1091 = vpack.c.b16 %v891, %v887
    %v1092 = vpack.c.b16 %v892, %v888
    %v1093 = vpack.c.b16 %v893, %v889
    %v1094 = vpack.c.b16 %v894, %v890
    %v1095 = vpack.c.b16 %v899, %v895
    %v1096 = vpack.c.b16 %v900, %v896
    %v1097 = vpack.c.b16 %v901, %v897
    %v1098 = vpack.c.b16 %v902, %v898
    %vm1295 = vcmask 130048
    %v1297 = vsel %vm1295, %v89, 0
    %v1300 = vsel %vm1295, %v96, 0
    %1302 = vmatprep.subr.bf16.mxu0 %v904
    %1303 = vmatpush1.bf16.msra.mxu0 %v903
    %1304 = vmatprep.subr.bf16.mxu0 %v908
    %1305 = vmatpush1.bf16.msra.mxu0 %v907
    %1306 = vmatprep.subr.bf16.mxu0 %v912
    %1307 = vmatpush1.bf16.msra.mxu0 %v911
    %1308 = vmatprep.subr.bf16.mxu0 %v916
    %1309 = vmatpush1.bf16.msra.mxu0 %v915
    %1310 = vmatprep.subr.bf16.mxu0 %v920
    %1311 = vmatpush1.bf16.msra.mxu0 %v919
    %1312 = vmatprep.subr.bf16.mxu0 %v924
    %1313 = vmatpush1.bf16.msra.mxu0 %v923
    %1314 = vmatprep.subr.bf16.mxu0 %v928
    %1315 = vmatpush1.bf16.msra.mxu0 %v927
    %1316 = vmatprep.subr.bf16.mxu0 %v932
    %1317 = vmatpush1.bf16.msra.mxu0 %v931
    %1318 = vmatprep.subr.bf16.mxu0 %v936
    %1319 = vmatpush1.bf16.msra.mxu0 %v935
    %1320 = vmatprep.subr.bf16.mxu0 %v940
    %1321 = vmatpush1.bf16.msra.mxu0 %v939
    %1322 = vmatprep.subr.bf16.mxu0 %v944
    %1323 = vmatpush1.bf16.msra.mxu0 %v943
    %1324 = vmatprep.subr.bf16.mxu0 %v948
    %1325 = vmatpush1.bf16.msra.mxu0 %v947
    %1326 = vmatprep.subr.bf16.mxu0 %v952
    %1327 = vmatpush1.bf16.msra.mxu0 %v951
    %1328 = vmatprep.subr.bf16.mxu0 %v956
    %1329 = vmatpush1.bf16.msra.mxu0 %v955
    %1330 = vmatprep.subr.bf16.mxu0 %v960
    %1331 = vmatpush1.bf16.msra.mxu0 %v959
    %1332 = vmatprep.subr.bf16.mxu0 %v964
    %1333 = vmatpush1.bf16.msra.mxu0 %v963
    %1334 = vmatprep.mubr.bf16.mxu0 %v84
    %1335 = vmatmul.mubr.bf16.gmra.mrb[0].mxu0 %v83
    %v1336 = vpop.f32.mrb[0].mxu0
    %v1337 = vadd.f32 %v298, %v1336
    %v1338 = vpop.f32.mrb[0].mxu0
    %v1339 = vadd.f32 %v302, %v1338
    %v1340 = vpop.f32.mrb[0].mxu0
    %v1341 = vadd.f32 %v298, %v1340
    %v1342 = vpop.f32.mrb[0].mxu0
    %v1343 = vadd.f32 %v302, %v1342
    %1344 = vmatprep.mubr.bf16.mxu0 %v91
    %1345 = vmatmul.mubr.bf16.gmra.mrb[0].mxu0 %v90
    %v1346 = vpop.f32.mrb[0].mxu0
    %v1347 = vadd.f32 %v298, %v1346
    %v1348 = vpop.f32.mrb[0].mxu0
    %v1349 = vadd.f32 %v302, %v1348
    %v1350 = vpop.f32.mrb[0].mxu0
    %v1351 = vadd.f32 %v298, %v1350
    %v1352 = vpop.f32.mrb[0].mxu0
    %v1353 = vadd.f32 %v302, %v1352
    %1354 = vdwg.mxu0
    %1355 = vmatprep.subr.bf16.mxu0 %v968
    %1356 = vmatpush1.bf16.msra.mxu0 %v967
    %1357 = vmatprep.subr.bf16.mxu0 %v972
    %1358 = vmatpush1.bf16.msra.mxu0 %v971
    %1359 = vmatprep.subr.bf16.mxu0 %v976
    %1360 = vmatpush1.bf16.msra.mxu0 %v975
    %1361 = vmatprep.subr.bf16.mxu0 %v980
    %1362 = vmatpush1.bf16.msra.mxu0 %v979
    %1363 = vmatprep.subr.bf16.mxu0 %v984
    %1364 = vmatpush1.bf16.msra.mxu0 %v983
    %1365 = vmatprep.subr.bf16.mxu0 %v988
    %1366 = vmatpush1.bf16.msra.mxu0 %v987
    %1367 = vmatprep.subr.bf16.mxu0 %v992
    %1368 = vmatpush1.bf16.msra.mxu0 %v991
    %1369 = vmatprep.subr.bf16.mxu0 %v996
    %1370 = vmatpush1.bf16.msra.mxu0 %v995
    %1371 = vmatprep.subr.bf16.mxu0 %v1000
    %1372 = vmatpush1.bf16.msra.mxu0 %v999
    %1373 = vmatprep.subr.bf16.mxu0 %v1004
    %1374 = vmatpush1.bf16.msra.mxu0 %v1003
    %1375 = vmatprep.subr.bf16.mxu0 %v1008
    %1376 = vmatpush1.bf16.msra.mxu0 %v1007
    %1377 = vmatprep.subr.bf16.mxu0 %v1012
    %1378 = vmatpush1.bf16.msra.mxu0 %v1011
    %1379 = vmatprep.subr.bf16.mxu0 %v1016
    %1380 = vmatpush1.bf16.msra.mxu0 %v1015
    %1381 = vmatprep.subr.bf16.mxu0 %v1020
    %1382 = vmatpush1.bf16.msra.mxu0 %v1019
    %1383 = vmatprep.subr.bf16.mxu0 %v1024
    %1384 = vmatpush1.bf16.msra.mxu0 %v1023
    %1385 = vmatprep.subr.bf16.mxu0 %v1028
    %1386 = vmatpush1.bf16.msra.mxu0 %v1027
    %1387 = vmatprep.mubr.bf16.mxu0 %v86
    %1388 = vmatmul.mubr.bf16.gmra.mrb[0].mxu0 %v85
    %v1389 = vpop.f32.mrb[0].mxu0
    %v1390 = vadd.f32 %v1337, %v1389
    %v1391 = vpop.f32.mrb[0].mxu0
    %v1392 = vadd.f32 %v1339, %v1391
    %v1393 = vpop.f32.mrb[0].mxu0
    %v1394 = vadd.f32 %v1341, %v1393
    %v1395 = vpop.f32.mrb[0].mxu0
    %v1396 = vadd.f32 %v1343, %v1395
    %1397 = vmatprep.mubr.bf16.mxu0 %v93
    %1398 = vmatmul.mubr.bf16.gmra.mrb[0].mxu0 %v92
    %v1399 = vpop.f32.mrb[0].mxu0
    %v1400 = vadd.f32 %v1347, %v1399
    %v1401 = vpop.f32.mrb[0].mxu0
    %v1402 = vadd.f32 %v1349, %v1401
    %v1403 = vpop.f32.mrb[0].mxu0
    %v1404 = vadd.f32 %v1351, %v1403
    %v1405 = vpop.f32.mrb[0].mxu0
    %v1406 = vadd.f32 %v1353, %v1405
    %1407 = vdwg.mxu0
    %1408 = vmatprep.subr.bf16.mxu0 %v1032
    %1409 = vmatpush1.bf16.msra.mxu0 %v1031
    %1410 = vmatprep.subr.bf16.mxu0 %v1036
    %1411 = vmatpush1.bf16.msra.mxu0 %v1035
    %1412 = vmatprep.subr.bf16.mxu0 %v1040
    %1413 = vmatpush1.bf16.msra.mxu0 %v1039
    %1414 = vmatprep.subr.bf16.mxu0 %v1044
    %1415 = vmatpush1.bf16.msra.mxu0 %v1043
    %1416 = vmatprep.subr.bf16.mxu0 %v1048
    %1417 = vmatpush1.bf16.msra.mxu0 %v1047
    %1418 = vmatprep.subr.bf16.mxu0 %v1052
    %1419 = vmatpush1.bf16.msra.mxu0 %v1051
    %1420 = vmatprep.subr.bf16.mxu0 %v1056
    %1421 = vmatpush1.bf16.msra.mxu0 %v1055
    %1422 = vmatprep.subr.bf16.mxu0 %v1060
    %1423 = vmatpush1.bf16.msra.mxu0 %v1059
    %1424 = vmatprep.subr.bf16.mxu0 %v1064
    %1425 = vmatpush1.bf16.msra.mxu0 %v1063
    %1426 = vmatprep.subr.bf16.mxu0 %v1068
    %1427 = vmatpush1.bf16.msra.mxu0 %v1067
    %1428 = vmatprep.subr.bf16.mxu0 %v1072
    %1429 = vmatpush1.bf16.msra.mxu0 %v1071
    %1430 = vmatprep.subr.bf16.mxu0 %v1076
    %1431 = vmatpush1.bf16.msra.mxu0 %v1075
    %1432 = vmatprep.subr.bf16.mxu0 %v1080
    %1433 = vmatpush1.bf16.msra.mxu0 %v1079
    %1434 = vmatprep.subr.bf16.mxu0 %v1084
    %1435 = vmatpush1.bf16.msra.mxu0 %v1083
    %1436 = vmatprep.subr.bf16.mxu0 %v1088
    %1437 = vmatpush1.bf16.msra.mxu0 %v1087
    %1438 = vmatprep.subr.bf16.mxu0 %v1092
    %1439 = vmatpush1.bf16.msra.mxu0 %v1091
    %1440 = vmatprep.mubr.bf16.mxu0 %v88
    %1441 = vmatmul.mubr.bf16.gmra.mrb[0].mxu0 %v87
    %v1442 = vpop.f32.mrb[0].mxu0
    %v1443 = vadd.f32 %v1390, %v1442
    %v1444 = vpop.f32.mrb[0].mxu0
    %v1445 = vadd.f32 %v1392, %v1444
    %v1446 = vpop.f32.mrb[0].mxu0
    %v1447 = vadd.f32 %v1394, %v1446
    %v1448 = vpop.f32.mrb[0].mxu0
    %v1449 = vadd.f32 %v1396, %v1448
    %1450 = vmatprep.mubr.bf16.mxu0 %v95
    %1451 = vmatmul.mubr.bf16.gmra.mrb[0].mxu0 %v94
    %v1452 = vpop.f32.mrb[0].mxu0
    %v1453 = vadd.f32 %v1400, %v1452
    %v1454 = vpop.f32.mrb[0].mxu0
    %v1455 = vadd.f32 %v1402, %v1454
    %v1456 = vpop.f32.mrb[0].mxu0
    %v1457 = vadd.f32 %v1404, %v1456
    %v1458 = vpop.f32.mrb[0].mxu0
    %v1459 = vadd.f32 %v1406, %v1458
    %1460 = vdwg.mxu0
    %1461 = vmatprep.subr.bf16.mxu0 %v1096
    %1462 = vmatpush1.bf16.msra.mxu0 %v1095
    %1463 = vmatprep.subr.bf16.mxu0 0
    %1464 = vmatpush1.bf16.msra.mxu0 0
    %1465 = vmatprep.subr.bf16.mxu0 0
    %1466 = vmatpush1.bf16.msra.mxu0 0
    %1467 = vmatprep.subr.bf16.mxu0 0
    %1468 = vmatpush1.bf16.msra.mxu0 0
    %1469 = vmatprep.subr.bf16.mxu0 0
    %1470 = vmatpush1.bf16.msra.mxu0 0
    %1471 = vmatprep.subr.bf16.mxu0 0
    %1472 = vmatpush1.bf16.msra.mxu0 0
    %1473 = vmatprep.subr.bf16.mxu0 0
    %1474 = vmatpush1.bf16.msra.mxu0 0
    %1475 = vmatprep.subr.bf16.mxu0 0
    %1476 = vmatpush1.bf16.msra.mxu0 0
    %1477 = vmatprep.subr.bf16.mxu0 0
    %1478 = vmatpush1.bf16.msra.mxu0 0
    %1479 = vmatprep.subr.bf16.mxu0 0
    %1480 = vmatpush1.bf16.msra.mxu0 0
    %1481 = vmatprep.subr.bf16.mxu0 0
    %1482 = vmatpush1.bf16.msra.mxu0 0
    %1483 = vmatprep.subr.bf16.mxu0 0
    %1484 = vmatpush1.bf16.msra.mxu0 0
    %1485 = vmatprep.subr.bf16.mxu0 0
    %1486 = vmatpush1.bf16.msra.mxu0 0
    %1487 = vmatprep.subr.bf16.mxu0 0
    %1488 = vmatpush1.bf16.msra.mxu0 0
    %1489 = vmatprep.subr.bf16.mxu0 0
    %1490 = vmatpush1.bf16.msra.mxu0 0
    %1491 = vmatprep.subr.bf16.mxu0 0
    %1492 = vmatpush1.bf16.msra.mxu0 0
    %1493 = vmatprep.mubr.bf16.mxu0 0
    %1494 = vmatmul.mubr.bf16.gmra.mrb[0].mxu0 %v1297
    %v1495 = vpop.f32.mrb[0].mxu0
    %v1496 = vadd.f32 %v1443, %v1495
    %v1497 = vpop.f32.mrb[0].mxu0
    %v1498 = vadd.f32 %v1445, %v1497
    %v1499 = vpop.f32.mrb[0].mxu0
    %v1500 = vadd.f32 %v1447, %v1499
    %v1501 = vpop.f32.mrb[0].mxu0
    %v1502 = vadd.f32 %v1449, %v1501
    %1503 = vmatprep.mubr.bf16.mxu0 0
    %1504 = vmatmul.mubr.bf16.gmra.mrb[0].mxu0 %v1300
    %v1505 = vpop.f32.mrb[0].mxu0
    %v1506 = vadd.f32 %v1453, %v1505
    %v1507 = vpop.f32.mrb[0].mxu0
    %v1508 = vadd.f32 %v1455, %v1507
    %v1509 = vpop.f32.mrb[0].mxu0
    %v1510 = vadd.f32 %v1457, %v1509
    %v1511 = vpop.f32.mrb[0].mxu0
    %v1512 = vadd.f32 %v1459, %v1511
    %1513 = vdwg.mxu0
    %1514 = vmatprep.subr.bf16.mxu0 %v906
    %1515 = vmatpush1.bf16.msra.mxu0 %v905
    %1516 = vmatprep.subr.bf16.mxu0 %v910
    %1517 = vmatpush1.bf16.msra.mxu0 %v909
    %1518 = vmatprep.subr.bf16.mxu0 %v914
    %1519 = vmatpush1.bf16.msra.mxu0 %v913
    %1520 = vmatprep.subr.bf16.mxu0 %v918
    %1521 = vmatpush1.bf16.msra.mxu0 %v917
    %1522 = vmatprep.subr.bf16.mxu0 %v922
    %1523 = vmatpush1.bf16.msra.mxu0 %v921
    %1524 = vmatprep.subr.bf16.mxu0 %v926
    %1525 = vmatpush1.bf16.msra.mxu0 %v925
    %1526 = vmatprep.subr.bf16.mxu0 %v930
    %1527 = vmatpush1.bf16.msra.mxu0 %v929
    %1528 = vmatprep.subr.bf16.mxu0 %v934
    %1529 = vmatpush1.bf16.msra.mxu0 %v933
    %1530 = vmatprep.subr.bf16.mxu0 %v938
    %1531 = vmatpush1.bf16.msra.mxu0 %v937
    %1532 = vmatprep.subr.bf16.mxu0 %v942
    %1533 = vmatpush1.bf16.msra.mxu0 %v941
    %1534 = vmatprep.subr.bf16.mxu0 %v946
    %1535 = vmatpush1.bf16.msra.mxu0 %v945
    %1536 = vmatprep.subr.bf16.mxu0 %v950
    %1537 = vmatpush1.bf16.msra.mxu0 %v949
    %1538 = vmatprep.subr.bf16.mxu0 %v954
    %1539 = vmatpush1.bf16.msra.mxu0 %v953
    %1540 = vmatprep.subr.bf16.mxu0 %v958
    %1541 = vmatpush1.bf16.msra.mxu0 %v957
    %1542 = vmatprep.subr.bf16.mxu0 %v962
    %1543 = vmatpush1.bf16.msra.mxu0 %v961
    %1544 = vmatprep.subr.bf16.mxu0 %v966
    %1545 = vmatpush1.bf16.msra.mxu0 %v965
    %1546 = vmatprep.mubr.bf16.mxu0 %v84
    %1547 = vmatmul.mubr.bf16.gmra.mrb[0].mxu0 %v83
    %v1548 = vpop.f32.mrb[0].mxu0
    %v1549 = vadd.f32 %v306, %v1548
    %v1550 = vpop.f32.mrb[0].mxu0
    %v1551 = vadd.f32 %v310, %v1550
    %v1552 = vpop.f32.mrb[0].mxu0
    %v1553 = vadd.f32 %v306, %v1552
    %v1554 = vpop.f32.mrb[0].mxu0
    %v1555 = vadd.f32 %v310, %v1554
    %1556 = vmatprep.mubr.bf16.mxu0 %v91
    %1557 = vmatmul.mubr.bf16.gmra.mrb[0].mxu0 %v90
    %v1558 = vpop.f32.mrb[0].mxu0
    %v1559 = vadd.f32 %v306, %v1558
    %v1560 = vpop.f32.mrb[0].mxu0
    %v1561 = vadd.f32 %v310, %v1560
    %v1562 = vpop.f32.mrb[0].mxu0
    %v1563 = vadd.f32 %v306, %v1562
    %v1564 = vpop.f32.mrb[0].mxu0
    %v1565 = vadd.f32 %v310, %v1564
    %1566 = vdwg.mxu0
    %1567 = vmatprep.subr.bf16.mxu0 %v970
    %1568 = vmatpush1.bf16.msra.mxu0 %v969
    %1569 = vmatprep.subr.bf16.mxu0 %v974
    %1570 = vmatpush1.bf16.msra.mxu0 %v973
    %1571 = vmatprep.subr.bf16.mxu0 %v978
    %1572 = vmatpush1.bf16.msra.mxu0 %v977
    %1573 = vmatprep.subr.bf16.mxu0 %v982
    %1574 = vmatpush1.bf16.msra.mxu0 %v981
    %1575 = vmatprep.subr.bf16.mxu0 %v986
    %1576 = vmatpush1.bf16.msra.mxu0 %v985
    %1577 = vmatprep.subr.bf16.mxu0 %v990
    %1578 = vmatpush1.bf16.msra.mxu0 %v989
    %1579 = vmatprep.subr.bf16.mxu0 %v994
    %1580 = vmatpush1.bf16.msra.mxu0 %v993
    %1581 = vmatprep.subr.bf16.mxu0 %v998
    %1582 = vmatpush1.bf16.msra.mxu0 %v997
    %1583 = vmatprep.subr.bf16.mxu0 %v1002
    %1584 = vmatpush1.bf16.msra.mxu0 %v1001
    %1585 = vmatprep.subr.bf16.mxu0 %v1006
    %1586 = vmatpush1.bf16.msra.mxu0 %v1005
    %1587 = vmatprep.subr.bf16.mxu0 %v1010
    %1588 = vmatpush1.bf16.msra.mxu0 %v1009
    %1589 = vmatprep.subr.bf16.mxu0 %v1014
    %1590 = vmatpush1.bf16.msra.mxu0 %v1013
    %1591 = vmatprep.subr.bf16.mxu0 %v1018
    %1592 = vmatpush1.bf16.msra.mxu0 %v1017
    %1593 = vmatprep.subr.bf16.mxu0 %v1022
    %1594 = vmatpush1.bf16.msra.mxu0 %v1021
    %1595 = vmatprep.subr.bf16.mxu0 %v1026
    %1596 = vmatpush1.bf16.msra.mxu0 %v1025
    %1597 = vmatprep.subr.bf16.mxu0 %v1030
    %1598 = vmatpush1.bf16.msra.mxu0 %v1029
    %1599 = vmatprep.mubr.bf16.mxu0 %v86
    %1600 = vmatmul.mubr.bf16.gmra.mrb[0].mxu0 %v85
    %v1601 = vpop.f32.mrb[0].mxu0
    %v1602 = vadd.f32 %v1549, %v1601
    %v1603 = vpop.f32.mrb[0].mxu0
    %v1604 = vadd.f32 %v1551, %v1603
    %v1605 = vpop.f32.mrb[0].mxu0
    %v1606 = vadd.f32 %v1553, %v1605
    %v1607 = vpop.f32.mrb[0].mxu0
    %v1608 = vadd.f32 %v1555, %v1607
    %1609 = vmatprep.mubr.bf16.mxu0 %v93
    %1610 = vmatmul.mubr.bf16.gmra.mrb[0].mxu0 %v92
    %v1611 = vpop.f32.mrb[0].mxu0
    %v1612 = vadd.f32 %v1559, %v1611
    %v1613 = vpop.f32.mrb[0].mxu0
    %v1614 = vadd.f32 %v1561, %v1613
    %v1615 = vpop.f32.mrb[0].mxu0
    %v1616 = vadd.f32 %v1563, %v1615
    %v1617 = vpop.f32.mrb[0].mxu0
    %v1618 = vadd.f32 %v1565, %v1617
    %1619 = vdwg.mxu0
    %1620 = vmatprep.subr.bf16.mxu0 %v1034
    %1621 = vmatpush1.bf16.msra.mxu0 %v1033
    %1622 = vmatprep.subr.bf16.mxu0 %v1038
    %1623 = vmatpush1.bf16.msra.mxu0 %v1037
    %1624 = vmatprep.subr.bf16.mxu0 %v1042
    %1625 = vmatpush1.bf16.msra.mxu0 %v1041
    %1626 = vmatprep.subr.bf16.mxu0 %v1046
    %1627 = vmatpush1.bf16.msra.mxu0 %v1045
    %1628 = vmatprep.subr.bf16.mxu0 %v1050
    %1629 = vmatpush1.bf16.msra.mxu0 %v1049
    %1630 = vmatprep.subr.bf16.mxu0 %v1054
    %1631 = vmatpush1.bf16.msra.mxu0 %v1053
    %1632 = vmatprep.subr.bf16.mxu0 %v1058
    %1633 = vmatpush1.bf16.msra.mxu0 %v1057
    %1634 = vmatprep.subr.bf16.mxu0 %v1062
    %1635 = vmatpush1.bf16.msra.mxu0 %v1061
    %1636 = vmatprep.subr.bf16.mxu0 %v1066
    %1637 = vmatpush1.bf16.msra.mxu0 %v1065
    %1638 = vmatprep.subr.bf16.mxu0 %v1070
    %1639 = vmatpush1.bf16.msra.mxu0 %v1069
    %1640 = vmatprep.subr.bf16.mxu0 %v1074
    %1641 = vmatpush1.bf16.msra.mxu0 %v1073
    %1642 = vmatprep.subr.bf16.mxu0 %v1078
    %1643 = vmatpush1.bf16.msra.mxu0 %v1077
    %1644 = vmatprep.subr.bf16.mxu0 %v1082
    %1645 = vmatpush1.bf16.msra.mxu0 %v1081
    %1646 = vmatprep.subr.bf16.mxu0 %v1086
    %1647 = vmatpush1.bf16.msra.mxu0 %v1085
    %1648 = vmatprep.subr.bf16.mxu0 %v1090
    %1649 = vmatpush1.bf16.msra.mxu0 %v1089
    %1650 = vmatprep.subr.bf16.mxu0 %v1094
    %1651 = vmatpush1.bf16.msra.mxu0 %v1093
    %1652 = vmatprep.mubr.bf16.mxu0 %v88
    %1653 = vmatmul.mubr.bf16.gmra.mrb[0].mxu0 %v87
    %v1654 = vpop.f32.mrb[0].mxu0
    %v1655 = vadd.f32 %v1602, %v1654
    %v1656 = vpop.f32.mrb[0].mxu0
    %v1657 = vadd.f32 %v1604, %v1656
    %v1658 = vpop.f32.mrb[0].mxu0
    %v1659 = vadd.f32 %v1606, %v1658
    %v1660 = vpop.f32.mrb[0].mxu0
    %v1661 = vadd.f32 %v1608, %v1660
    %1662 = vmatprep.mubr.bf16.mxu0 %v95
    %1663 = vmatmul.mubr.bf16.gmra.mrb[0].mxu0 %v94
    %v1664 = vpop.f32.mrb[0].mxu0
    %v1665 = vadd.f32 %v1612, %v1664
    %v1666 = vpop.f32.mrb[0].mxu0
    %v1667 = vadd.f32 %v1614, %v1666
    %v1668 = vpop.f32.mrb[0].mxu0
    %v1669 = vadd.f32 %v1616, %v1668
    %v1670 = vpop.f32.mrb[0].mxu0
    %v1671 = vadd.f32 %v1618, %v1670
    %1672 = vdwg.mxu0
    %1673 = vmatprep.subr.bf16.mxu0 %v1098
    %1674 = vmatpush1.bf16.msra.mxu0 %v1097
    %1675 = vmatprep.subr.bf16.mxu0 0
    %1676 = vmatpush1.bf16.msra.mxu0 0
    %1677 = vmatprep.subr.bf16.mxu0 0
    %1678 = vmatpush1.bf16.msra.mxu0 0
    %1679 = vmatprep.subr.bf16.mxu0 0
    %1680 = vmatpush1.bf16.msra.mxu0 0
    %1681 = vmatprep.subr.bf16.mxu0 0
    %1682 = vmatpush1.bf16.msra.mxu0 0
    %1683 = vmatprep.subr.bf16.mxu0 0
    %1684 = vmatpush1.bf16.msra.mxu0 0
    %1685 = vmatprep.subr.bf16.mxu0 0
    %1686 = vmatpush1.bf16.msra.mxu0 0
    %1687 = vmatprep.subr.bf16.mxu0 0
    %1688 = vmatpush1.bf16.msra.mxu0 0
    %1689 = vmatprep.subr.bf16.mxu0 0
    %1690 = vmatpush1.bf16.msra.mxu0 0
    %1691 = vmatprep.subr.bf16.mxu0 0
    %1692 = vmatpush1.bf16.msra.mxu0 0
    %1693 = vmatprep.subr.bf16.mxu0 0
    %1694 = vmatpush1.bf16.msra.mxu0 0
    %1695 = vmatprep.subr.bf16.mxu0 0
    %1696 = vmatpush1.bf16.msra.mxu0 0
    %1697 = vmatprep.subr.bf16.mxu0 0
    %1698 = vmatpush1.bf16.msra.mxu0 0
    %1699 = vmatprep.subr.bf16.mxu0 0
    %1700 = vmatpush1.bf16.msra.mxu0 0
    %1701 = vmatprep.subr.bf16.mxu0 0
    %1702 = vmatpush1.bf16.msra.mxu0 0
    %1703 = vmatprep.subr.bf16.mxu0 0
    %1704 = vmatpush1.bf16.msra.mxu0 0
    %1705 = vmatprep.mubr.bf16.mxu0 0
    %1706 = vmatmul.mubr.bf16.gmra.mrb[0].mxu0 %v1297
    %v1707 = vpop.f32.mrb[0].mxu0
    %v1708 = vadd.f32 %v1655, %v1707
    %v1709 = vpop.f32.mrb[0].mxu0
    %v1710 = vadd.f32 %v1657, %v1709
    %v1711 = vpop.f32.mrb[0].mxu0
    %v1712 = vadd.f32 %v1659, %v1711
    %v1713 = vpop.f32.mrb[0].mxu0
    %v1714 = vadd.f32 %v1661, %v1713
    %1715 = vmatprep.mubr.bf16.mxu0 0
    %1716 = vmatmul.mubr.bf16.gmra.mrb[0].mxu0 %v1300
    %v1717 = vpop.f32.mrb[0].mxu0
    %v1718 = vadd.f32 %v1665, %v1717
    %v1719 = vpop.f32.mrb[0].mxu0
    %v1720 = vadd.f32 %v1667, %v1719
    %v1721 = vpop.f32.mrb[0].mxu0
    %v1722 = vadd.f32 %v1669, %v1721
    %v1723 = vpop.f32.mrb[0].mxu0
    %v1724 = vadd.f32 %v1671, %v1723
    %1725 = vdwg.mxu0
    %v1726 = vmax.f32 %v1496, 0.0
    %v1727 = vmax.f32 %v1498, 0.0
    %v1728 = vmax.f32 %v1708, 0.0
    %v1729 = vmax.f32 %v1710, 0.0
    %v1730 = vmax.f32 %v1500, 0.0
    %v1731 = vmax.f32 %v1502, 0.0
    %v1732 = vmax.f32 %v1712, 0.0
    %v1733 = vmax.f32 %v1714, 0.0
    %v1734 = vmax.f32 %v1506, 0.0
    %v1735 = vmax.f32 %v1508, 0.0
    %v1736 = vmax.f32 %v1718, 0.0
    %v1737 = vmax.f32 %v1720, 0.0
    %v1738 = vmax.f32 %v1510, 0.0
    %v1739 = vmax.f32 %v1512, 0.0
    %v1740 = vmax.f32 %v1722, 0.0
    %v1741 = vmax.f32 %v1724, 0.0
    %v1742 = vpack.c.bf16 %v1730, %v1726
    %v1743 = vpack.c.bf16 %v1731, %v1727
    %v1744 = vpack.c.bf16 %v1732, %v1728
    %v1745 = vpack.c.bf16 %v1733, %v1729
    %v1746 = vpack.c.bf16 %v1738, %v1734
    %v1747 = vpack.c.bf16 %v1739, %v1735
    %v1748 = vpack.c.bf16 %v1740, %v1736
    %v1749 = vpack.c.bf16 %v1741, %v1737
    %v1750 = vld [vmem:[#allocation4] sm:$0xff]
    %v1751 = vld [vmem:[#allocation4 + $0x8] sm:$0xff]
    %v1752 = vld [vmem:[#allocation4 + $0x10] sm:$0xff]
    %v1753 = vld [vmem:[#allocation4 + $0x18] sm:$0xff]
    %v1754 = vld [vmem:[#allocation4 + $0x20] sm:$0xff]
    %v1755 = vld [vmem:[#allocation4 + $0x28] sm:$0xff]
    %v1756 = vld [vmem:[#allocation4 + $0x30] sm:$0xff]
    %v1757 = vld [vmem:[#allocation4 + $0x38] sm:$0xff]
    %v1758 = vld [vmem:[#allocation4 + $0x40] sm:$0xff]
    %v1759 = vld [vmem:[#allocation4 + $0x48] sm:$0xff]
    %v1760 = vld [vmem:[#allocation4 + $0x50] sm:$0xff]
    %v1761 = vld [vmem:[#allocation4 + $0x58] sm:$0xff]
    %v1762 = vld [vmem:[#allocation4 + $0x60] sm:$0xff]
    %v1763 = vld [vmem:[#allocation4 + $0x68] sm:$0xff]
    %v1764 = vld [vmem:[#allocation4 + $0x70] sm:$0xff]
    %v1765 = vld [vmem:[#allocation4 + $0x78] sm:$0xff]
    %v1766 = vld [vmem:[#allocation4 + $0x80] sm:$0xff]
    %v1767 = vld [vmem:[#allocation4 + $0x88] sm:$0xff]
    %v1768 = vld [vmem:[#allocation4 + $0x90] sm:$0xff]
    %v1769 = vld [vmem:[#allocation4 + $0x98] sm:$0xff]
    %v1770 = vld [vmem:[#allocation4 + $0xa0] sm:$0xff]
    %v1771 = vld [vmem:[#allocation4 + $0xa8] sm:$0xff]
    %v1772 = vld [vmem:[#allocation4 + $0xb0] sm:$0xff]
    %v1773 = vld [vmem:[#allocation4 + $0xb8] sm:$0xff]
    %v1774 = vld [vmem:[#allocation4 + $0xc0] sm:$0xff]
    %v1775 = vld [vmem:[#allocation4 + $0xc8] sm:$0xff]
    %v1776 = vld [vmem:[#allocation4 + $0xd0] sm:$0xff]
    %v1777 = vld [vmem:[#allocation4 + $0xd8] sm:$0xff]
    %v1778 = vld [vmem:[#allocation4 + $0xe0] sm:$0xff]
    %v1779 = vld [vmem:[#allocation4 + $0xe8] sm:$0xff]
    %v1780 = vld [vmem:[#allocation4 + $0xf0] sm:$0xff]
    %v1781 = vld [vmem:[#allocation4 + $0xf8] sm:$0xff]
    %v1782 = vld [vmem:[#allocation4 + $0x100] sm:$0xff]
    %v1783 = vld [vmem:[#allocation4 + $0x108] sm:$0xff]
    %v1784 = vld [vmem:[#allocation4 + $0x110] sm:$0xff]
    %v1785 = vld [vmem:[#allocation4 + $0x118] sm:$0xff]
    %v1786 = vld [vmem:[#allocation4 + $0x120] sm:$0xff]
    %v1787 = vld [vmem:[#allocation4 + $0x128] sm:$0xff]
    %v1788 = vld [vmem:[#allocation4 + $0x130] sm:$0xff]
    %v1789 = vld [vmem:[#allocation4 + $0x138] sm:$0xff]
    %v1790 = vld [vmem:[#allocation4 + $0x140] sm:$0xff]
    %v1791 = vld [vmem:[#allocation4 + $0x148] sm:$0xff]
    %v1792 = vld [vmem:[#allocation4 + $0x150] sm:$0xff]
    %v1793 = vld [vmem:[#allocation4 + $0x158] sm:$0xff]
    %v1794 = vld [vmem:[#allocation4 + $0x160] sm:$0xff]
    %v1795 = vld [vmem:[#allocation4 + $0x168] sm:$0xff]
    %v1796 = vld [vmem:[#allocation4 + $0x170] sm:$0xff]
    %v1797 = vld [vmem:[#allocation4 + $0x178] sm:$0xff]
    %v1798 = vld [vmem:[#allocation4 + $0x180] sm:$0xff]
    %v1799 = vld [vmem:[#allocation4 + $0x188] sm:$0xff]
    %v1800 = vld [vmem:[#allocation4 + $0x190] sm:$0xff]
    %v1801 = vld [vmem:[#allocation4 + $0x198] sm:$0xff]
    %v1802 = vld [vmem:[#allocation4 + $0x1a0] sm:$0xff]
    %v1803 = vld [vmem:[#allocation4 + $0x1a8] sm:$0xff]
    %v1804 = vld [vmem:[#allocation4 + $0x1b0] sm:$0xff]
    %v1805 = vld [vmem:[#allocation4 + $0x1b8] sm:$0xff]
    %v1806 = vld [vmem:[#allocation4 + $0x1c0] sm:$0xff]
    %v1807 = vld [vmem:[#allocation4 + $0x1c8] sm:$0xff]
    %v1808 = vld [vmem:[#allocation4 + $0x1d0] sm:$0xff]
    %v1809 = vld [vmem:[#allocation4 + $0x1d8] sm:$0xff]
    %v1810 = vld [vmem:[#allocation4 + $0x1e0] sm:$0xff]
    %v1811 = vld [vmem:[#allocation4 + $0x1e8] sm:$0xff]
    %v1812 = vld [vmem:[#allocation4 + $0x1f0] sm:$0xff]
    %v1813 = vld [vmem:[#allocation4 + $0x1f8] sm:$0xff]
    %v1814 = vld [vmem:[#allocation4 + $0x200] sm:$0xff]
    %v1815 = vld [vmem:[#allocation4 + $0x208] sm:$0xff]
    %v1816 = vld [vmem:[#allocation4 + $0x210] sm:$0xff]
    %v1817 = vld [vmem:[#allocation4 + $0x218] sm:$0xff]
    %v1818 = vld [vmem:[#allocation4 + $0x220] sm:$0xff]
    %v1819 = vld [vmem:[#allocation4 + $0x228] sm:$0xff]
    %v1820 = vld [vmem:[#allocation4 + $0x230] sm:$0xff]
    %v1821 = vld [vmem:[#allocation4 + $0x238] sm:$0xff]
    %v1822 = vld [vmem:[#allocation4 + $0x240] sm:$0xff]
    %v1823 = vld [vmem:[#allocation4 + $0x248] sm:$0xff]
    %v1824 = vld [vmem:[#allocation4 + $0x250] sm:$0xff]
    %v1825 = vld [vmem:[#allocation4 + $0x258] sm:$0xff]
    %v1826 = vld [vmem:[#allocation4 + $0x260] sm:$0xff]
    %v1827 = vld [vmem:[#allocation4 + $0x268] sm:$0xff]
    %v1828 = vld [vmem:[#allocation4 + $0x270] sm:$0xff]
    %v1829 = vld [vmem:[#allocation4 + $0x278] sm:$0xff]
    %v1830 = vld [vmem:[#allocation4 + $0x280] sm:$0xff]
    %v1831 = vld [vmem:[#allocation4 + $0x288] sm:$0xff]
    %v1832 = vld [vmem:[#allocation4 + $0x290] sm:$0xff]
    %v1833 = vld [vmem:[#allocation4 + $0x298] sm:$0xff]
    %v1834 = vld [vmem:[#allocation4 + $0x2a0] sm:$0xff]
    %v1835 = vld [vmem:[#allocation4 + $0x2a8] sm:$0xff]
    %v1836 = vld [vmem:[#allocation4 + $0x2b0] sm:$0xff]
    %v1837 = vld [vmem:[#allocation4 + $0x2b8] sm:$0xff]
    %v1838 = vld [vmem:[#allocation4 + $0x2c0] sm:$0xff]
    %v1839 = vld [vmem:[#allocation4 + $0x2c8] sm:$0xff]
    %v1840 = vld [vmem:[#allocation4 + $0x2d0] sm:$0xff]
    %v1841 = vld [vmem:[#allocation4 + $0x2d8] sm:$0xff]
    %v1842 = vld [vmem:[#allocation4 + $0x2e0] sm:$0xff]
    %v1843 = vld [vmem:[#allocation4 + $0x2e8] sm:$0xff]
    %v1844 = vld [vmem:[#allocation4 + $0x2f0] sm:$0xff]
    %v1845 = vld [vmem:[#allocation4 + $0x2f8] sm:$0xff]
    %v1846 = vld [vmem:[#allocation4 + $0x300] sm:$0xff]
    %v1847 = vld [vmem:[#allocation4 + $0x308] sm:$0xff]
    %v1848 = vld [vmem:[#allocation4 + $0x310] sm:$0xff]
    %v1849 = vld [vmem:[#allocation4 + $0x318] sm:$0xff]
    %v1850 = vld [vmem:[#allocation4 + $0x320] sm:$0xff]
    %v1851 = vld [vmem:[#allocation4 + $0x328] sm:$0xff]
    %v1852 = vld [vmem:[#allocation4 + $0x330] sm:$0xff]
    %v1853 = vld [vmem:[#allocation4 + $0x338] sm:$0xff]
    %v1854 = vld [vmem:[#allocation4 + $0x340] sm:$0xff]
    %v1855 = vld [vmem:[#allocation4 + $0x348] sm:$0xff]
    %v1856 = vld [vmem:[#allocation4 + $0x350] sm:$0xff]
    %v1857 = vld [vmem:[#allocation4 + $0x358] sm:$0xff]
    %v1858 = vld [vmem:[#allocation4 + $0x360] sm:$0xff]
    %v1859 = vld [vmem:[#allocation4 + $0x368] sm:$0xff]
    %v1860 = vld [vmem:[#allocation4 + $0x370] sm:$0xff]
    %v1861 = vld [vmem:[#allocation4 + $0x378] sm:$0xff]
    %v1862 = vld [vmem:[#allocation4 + $0x380] sm:$0xff]
    %v1863 = vld [vmem:[#allocation4 + $0x388] sm:$0xff]
    %v1864 = vld [vmem:[#allocation4 + $0x390] sm:$0xff]
    %v1865 = vld [vmem:[#allocation4 + $0x398] sm:$0xff]
    %v1866 = vld [vmem:[#allocation4 + $0x3a0] sm:$0xff]
    %v1867 = vld [vmem:[#allocation4 + $0x3a8] sm:$0xff]
    %v1868 = vld [vmem:[#allocation4 + $0x3b0] sm:$0xff]
    %v1869 = vld [vmem:[#allocation4 + $0x3b8] sm:$0xff]
    %v1870 = vld [vmem:[#allocation4 + $0x3c0] sm:$0xff]
    %v1871 = vld [vmem:[#allocation4 + $0x3c8] sm:$0xff]
    %v1872 = vld [vmem:[#allocation4 + $0x3d0] sm:$0xff]
    %v1873 = vld [vmem:[#allocation4 + $0x3d8] sm:$0xff]
    %v1874 = vld [vmem:[#allocation4 + $0x3e0] sm:$0xff]
    %v1875 = vld [vmem:[#allocation4 + $0x3e8] sm:$0xff]
    %v1876 = vld [vmem:[#allocation4 + $0x3f0] sm:$0xff]
    %v1877 = vld [vmem:[#allocation4 + $0x3f8] sm:$0xff]
    %v1878 = vld [vmem:[%s4] sm:$0xf]
    %v1880 = vlaneseq
    %v1881 = vshrl.u32 %v1880, 7
    %v1882 = vsub.s32 0, %v1881
    %v1883 = vrot.slane %v1878, %v1882
    %v1884 = vlaneseq
    %v1885 = vshrl.u32 %v1884, 7
    %v1886 = vsub.s32 1, %v1885
    %v1887 = vrot.slane %v1878, %v1886
    %v1888 = vlaneseq
    %v1889 = vshrl.u32 %v1888, 7
    %v1890 = vsub.s32 2, %v1889
    %v1891 = vrot.slane %v1878, %v1890
    %v1892 = vlaneseq
    %v1893 = vshrl.u32 %v1892, 7
    %v1894 = vsub.s32 3, %v1893
    %v1895 = vrot.slane %v1878, %v1894
    %v2028 = vunpack.c.l.b16 %v1750
    %v2029 = vunpack.c.h.b16 %v1750
    %v2030 = vunpack.c.l.b16 %v1751
    %v2031 = vunpack.c.h.b16 %v1751
    %v2032 = vunpack.c.l.b16 %v1752
    %v2033 = vunpack.c.h.b16 %v1752
    %v2034 = vunpack.c.l.b16 %v1753
    %v2035 = vunpack.c.h.b16 %v1753
    %v2036 = vunpack.c.l.b16 %v1754
    %v2037 = vunpack.c.h.b16 %v1754
    %v2038 = vunpack.c.l.b16 %v1755
    %v2039 = vunpack.c.h.b16 %v1755
    %v2040 = vunpack.c.l.b16 %v1756
    %v2041 = vunpack.c.h.b16 %v1756
    %v2042 = vunpack.c.l.b16 %v1757
    %v2043 = vunpack.c.h.b16 %v1757
    %v2044 = vunpack.c.l.b16 %v1758
    %v2045 = vunpack.c.h.b16 %v1758
    %v2046 = vunpack.c.l.b16 %v1759
    %v2047 = vunpack.c.h.b16 %v1759
    %v2048 = vunpack.c.l.b16 %v1760
    %v2049 = vunpack.c.h.b16 %v1760
    %v2050 = vunpack.c.l.b16 %v1761
    %v2051 = vunpack.c.h.b16 %v1761
    %v2052 = vunpack.c.l.b16 %v1762
    %v2053 = vunpack.c.h.b16 %v1762
    %v2054 = vunpack.c.l.b16 %v1763
    %v2055 = vunpack.c.h.b16 %v1763
    %v2056 = vunpack.c.l.b16 %v1764
    %v2057 = vunpack.c.h.b16 %v1764
    %v2058 = vunpack.c.l.b16 %v1765
    %v2059 = vunpack.c.h.b16 %v1765
    %v2060 = vunpack.c.l.b16 %v1766
    %v2061 = vunpack.c.h.b16 %v1766
    %v2062 = vunpack.c.l.b16 %v1767
    %v2063 = vunpack.c.h.b16 %v1767
    %v2064 = vunpack.c.l.b16 %v1768
    %v2065 = vunpack.c.h.b16 %v1768
    %v2066 = vunpack.c.l.b16 %v1769
    %v2067 = vunpack.c.h.b16 %v1769
    %v2068 = vunpack.c.l.b16 %v1770
    %v2069 = vunpack.c.h.b16 %v1770
    %v2070 = vunpack.c.l.b16 %v1771
    %v2071 = vunpack.c.h.b16 %v1771
    %v2072 = vunpack.c.l.b16 %v1772
    %v2073 = vunpack.c.h.b16 %v1772
    %v2074 = vunpack.c.l.b16 %v1773
    %v2075 = vunpack.c.h.b16 %v1773
    %v2076 = vunpack.c.l.b16 %v1774
    %v2077 = vunpack.c.h.b16 %v1774
    %v2078 = vunpack.c.l.b16 %v1775
    %v2079 = vunpack.c.h.b16 %v1775
    %v2080 = vunpack.c.l.b16 %v1776
    %v2081 = vunpack.c.h.b16 %v1776
    %v2082 = vunpack.c.l.b16 %v1777
    %v2083 = vunpack.c.h.b16 %v1777
    %v2084 = vunpack.c.l.b16 %v1778
    %v2085 = vunpack.c.h.b16 %v1778
    %v2086 = vunpack.c.l.b16 %v1779
    %v2087 = vunpack.c.h.b16 %v1779
    %v2088 = vunpack.c.l.b16 %v1780
    %v2089 = vunpack.c.h.b16 %v1780
    %v2090 = vunpack.c.l.b16 %v1781
    %v2091 = vunpack.c.h.b16 %v1781
    %v2092 = vunpack.c.l.b16 %v1782
    %v2093 = vunpack.c.h.b16 %v1782
    %v2094 = vunpack.c.l.b16 %v1783
    %v2095 = vunpack.c.h.b16 %v1783
    %v2096 = vunpack.c.l.b16 %v1784
    %v2097 = vunpack.c.h.b16 %v1784
    %v2098 = vunpack.c.l.b16 %v1785
    %v2099 = vunpack.c.h.b16 %v1785
    %v2100 = vunpack.c.l.b16 %v1786
    %v2101 = vunpack.c.h.b16 %v1786
    %v2102 = vunpack.c.l.b16 %v1787
    %v2103 = vunpack.c.h.b16 %v1787
    %v2104 = vunpack.c.l.b16 %v1788
    %v2105 = vunpack.c.h.b16 %v1788
    %v2106 = vunpack.c.l.b16 %v1789
    %v2107 = vunpack.c.h.b16 %v1789
    %v2108 = vunpack.c.l.b16 %v1790
    %v2109 = vunpack.c.h.b16 %v1790
    %v2110 = vunpack.c.l.b16 %v1791
    %v2111 = vunpack.c.h.b16 %v1791
    %v2112 = vunpack.c.l.b16 %v1792
    %v2113 = vunpack.c.h.b16 %v1792
    %v2114 = vunpack.c.l.b16 %v1793
    %v2115 = vunpack.c.h.b16 %v1793
    %v2116 = vunpack.c.l.b16 %v1794
    %v2117 = vunpack.c.h.b16 %v1794
    %v2118 = vunpack.c.l.b16 %v1795
    %v2119 = vunpack.c.h.b16 %v1795
    %v2120 = vunpack.c.l.b16 %v1796
    %v2121 = vunpack.c.h.b16 %v1796
    %v2122 = vunpack.c.l.b16 %v1797
    %v2123 = vunpack.c.h.b16 %v1797
    %v2124 = vunpack.c.l.b16 %v1798
    %v2125 = vunpack.c.h.b16 %v1798
    %v2126 = vunpack.c.l.b16 %v1799
    %v2127 = vunpack.c.h.b16 %v1799
    %v2128 = vunpack.c.l.b16 %v1800
    %v2129 = vunpack.c.h.b16 %v1800
    %v2130 = vunpack.c.l.b16 %v1801
    %v2131 = vunpack.c.h.b16 %v1801
    %v2132 = vunpack.c.l.b16 %v1802
    %v2133 = vunpack.c.h.b16 %v1802
    %v2134 = vunpack.c.l.b16 %v1803
    %v2135 = vunpack.c.h.b16 %v1803
    %v2136 = vunpack.c.l.b16 %v1804
    %v2137 = vunpack.c.h.b16 %v1804
    %v2138 = vunpack.c.l.b16 %v1805
    %v2139 = vunpack.c.h.b16 %v1805
    %v2140 = vunpack.c.l.b16 %v1806
    %v2141 = vunpack.c.h.b16 %v1806
    %v2142 = vunpack.c.l.b16 %v1807
    %v2143 = vunpack.c.h.b16 %v1807
    %v2144 = vunpack.c.l.b16 %v1808
    %v2145 = vunpack.c.h.b16 %v1808
    %v2146 = vunpack.c.l.b16 %v1809
    %v2147 = vunpack.c.h.b16 %v1809
    %v2148 = vunpack.c.l.b16 %v1810
    %v2149 = vunpack.c.h.b16 %v1810
    %v2150 = vunpack.c.l.b16 %v1811
    %v2151 = vunpack.c.h.b16 %v1811
    %v2152 = vunpack.c.l.b16 %v1812
    %v2153 = vunpack.c.h.b16 %v1812
    %v2154 = vunpack.c.l.b16 %v1813
    %v2155 = vunpack.c.h.b16 %v1813
    %v2156 = vunpack.c.l.b16 %v1814
    %v2157 = vunpack.c.h.b16 %v1814
    %v2158 = vunpack.c.l.b16 %v1815
    %v2159 = vunpack.c.h.b16 %v1815
    %v2160 = vunpack.c.l.b16 %v1816
    %v2161 = vunpack.c.h.b16 %v1816
    %v2162 = vunpack.c.l.b16 %v1817
    %v2163 = vunpack.c.h.b16 %v1817
    %v2164 = vunpack.c.l.b16 %v1818
    %v2165 = vunpack.c.h.b16 %v1818
    %v2166 = vunpack.c.l.b16 %v1819
    %v2167 = vunpack.c.h.b16 %v1819
    %v2168 = vunpack.c.l.b16 %v1820
    %v2169 = vunpack.c.h.b16 %v1820
    %v2170 = vunpack.c.l.b16 %v1821
    %v2171 = vunpack.c.h.b16 %v1821
    %v2172 = vunpack.c.l.b16 %v1822
    %v2173 = vunpack.c.h.b16 %v1822
    %v2174 = vunpack.c.l.b16 %v1823
    %v2175 = vunpack.c.h.b16 %v1823
    %v2176 = vunpack.c.l.b16 %v1824
    %v2177 = vunpack.c.h.b16 %v1824
    %v2178 = vunpack.c.l.b16 %v1825
    %v2179 = vunpack.c.h.b16 %v1825
    %v2180 = vunpack.c.l.b16 %v1826
    %v2181 = vunpack.c.h.b16 %v1826
    %v2182 = vunpack.c.l.b16 %v1827
    %v2183 = vunpack.c.h.b16 %v1827
    %v2184 = vunpack.c.l.b16 %v1828
    %v2185 = vunpack.c.h.b16 %v1828
    %v2186 = vunpack.c.l.b16 %v1829
    %v2187 = vunpack.c.h.b16 %v1829
    %v2188 = vunpack.c.l.b16 %v1830
    %v2189 = vunpack.c.h.b16 %v1830
    %v2190 = vunpack.c.l.b16 %v1831
    %v2191 = vunpack.c.h.b16 %v1831
    %v2192 = vunpack.c.l.b16 %v1832
    %v2193 = vunpack.c.h.b16 %v1832
    %v2194 = vunpack.c.l.b16 %v1833
    %v2195 = vunpack.c.h.b16 %v1833
    %v2196 = vunpack.c.l.b16 %v1834
    %v2197 = vunpack.c.h.b16 %v1834
    %v2198 = vunpack.c.l.b16 %v1835
    %v2199 = vunpack.c.h.b16 %v1835
    %v2200 = vunpack.c.l.b16 %v1836
    %v2201 = vunpack.c.h.b16 %v1836
    %v2202 = vunpack.c.l.b16 %v1837
    %v2203 = vunpack.c.h.b16 %v1837
    %v2204 = vunpack.c.l.b16 %v1838
    %v2205 = vunpack.c.h.b16 %v1838
    %v2206 = vunpack.c.l.b16 %v1839
    %v2207 = vunpack.c.h.b16 %v1839
    %v2208 = vunpack.c.l.b16 %v1840
    %v2209 = vunpack.c.h.b16 %v1840
    %v2210 = vunpack.c.l.b16 %v1841
    %v2211 = vunpack.c.h.b16 %v1841
    %v2212 = vunpack.c.l.b16 %v1842
    %v2213 = vunpack.c.h.b16 %v1842
    %v2214 = vunpack.c.l.b16 %v1843
    %v2215 = vunpack.c.h.b16 %v1843
    %v2216 = vunpack.c.l.b16 %v1844
    %v2217 = vunpack.c.h.b16 %v1844
    %v2218 = vunpack.c.l.b16 %v1845
    %v2219 = vunpack.c.h.b16 %v1845
    %v2220 = vunpack.c.l.b16 %v1846
    %v2221 = vunpack.c.h.b16 %v1846
    %v2222 = vunpack.c.l.b16 %v1847
    %v2223 = vunpack.c.h.b16 %v1847
    %v2224 = vunpack.c.l.b16 %v1848
    %v2225 = vunpack.c.h.b16 %v1848
    %v2226 = vunpack.c.l.b16 %v1849
    %v2227 = vunpack.c.h.b16 %v1849
    %v2228 = vunpack.c.l.b16 %v1850
    %v2229 = vunpack.c.h.b16 %v1850
    %v2230 = vunpack.c.l.b16 %v1851
    %v2231 = vunpack.c.h.b16 %v1851
    %v2232 = vunpack.c.l.b16 %v1852
    %v2233 = vunpack.c.h.b16 %v1852
    %v2234 = vunpack.c.l.b16 %v1853
    %v2235 = vunpack.c.h.b16 %v1853
    %v2236 = vunpack.c.l.b16 %v1854
    %v2237 = vunpack.c.h.b16 %v1854
    %v2238 = vunpack.c.l.b16 %v1855
    %v2239 = vunpack.c.h.b16 %v1855
    %v2240 = vunpack.c.l.b16 %v1856
    %v2241 = vunpack.c.h.b16 %v1856
    %v2242 = vunpack.c.l.b16 %v1857
    %v2243 = vunpack.c.h.b16 %v1857
    %v2244 = vunpack.c.l.b16 %v1858
    %v2245 = vunpack.c.h.b16 %v1858
    %v2246 = vunpack.c.l.b16 %v1859
    %v2247 = vunpack.c.h.b16 %v1859
    %v2248 = vunpack.c.l.b16 %v1860
    %v2249 = vunpack.c.h.b16 %v1860
    %v2250 = vunpack.c.l.b16 %v1861
    %v2251 = vunpack.c.h.b16 %v1861
    %v2252 = vunpack.c.l.b16 %v1862
    %v2253 = vunpack.c.h.b16 %v1862
    %v2254 = vunpack.c.l.b16 %v1863
    %v2255 = vunpack.c.h.b16 %v1863
    %v2256 = vunpack.c.l.b16 %v1864
    %v2257 = vunpack.c.h.b16 %v1864
    %v2258 = vunpack.c.l.b16 %v1865
    %v2259 = vunpack.c.h.b16 %v1865
    %v2260 = vunpack.c.l.b16 %v1866
    %v2261 = vunpack.c.h.b16 %v1866
    %v2262 = vunpack.c.l.b16 %v1867
    %v2263 = vunpack.c.h.b16 %v1867
    %v2264 = vunpack.c.l.b16 %v1868
    %v2265 = vunpack.c.h.b16 %v1868
    %v2266 = vunpack.c.l.b16 %v1869
    %v2267 = vunpack.c.h.b16 %v1869
    %v2268 = vunpack.c.l.b16 %v1870
    %v2269 = vunpack.c.h.b16 %v1870
    %v2270 = vunpack.c.l.b16 %v1871
    %v2271 = vunpack.c.h.b16 %v1871
    %v2272 = vunpack.c.l.b16 %v1872
    %v2273 = vunpack.c.h.b16 %v1872
    %v2274 = vunpack.c.l.b16 %v1873
    %v2275 = vunpack.c.h.b16 %v1873
    %v2276 = vunpack.c.l.b16 %v1874
    %v2277 = vunpack.c.h.b16 %v1874
    %v2278 = vunpack.c.l.b16 %v1875
    %v2279 = vunpack.c.h.b16 %v1875
    %v2280 = vunpack.c.l.b16 %v1876
    %v2281 = vunpack.c.h.b16 %v1876
    %v2282 = vunpack.c.l.b16 %v1877
    %v2283 = vunpack.c.h.b16 %v1877
    %v2284 = vpack.c.b16 %v2032, %v2028
    %v2285 = vpack.c.b16 %v2033, %v2029
    %v2286 = vpack.c.b16 %v2034, %v2030
    %v2287 = vpack.c.b16 %v2035, %v2031
    %v2288 = vpack.c.b16 %v2040, %v2036
    %v2289 = vpack.c.b16 %v2041, %v2037
    %v2290 = vpack.c.b16 %v2042, %v2038
    %v2291 = vpack.c.b16 %v2043, %v2039
    %v2292 = vpack.c.b16 %v2048, %v2044
    %v2293 = vpack.c.b16 %v2049, %v2045
    %v2294 = vpack.c.b16 %v2050, %v2046
    %v2295 = vpack.c.b16 %v2051, %v2047
    %v2296 = vpack.c.b16 %v2056, %v2052
    %v2297 = vpack.c.b16 %v2057, %v2053
    %v2298 = vpack.c.b16 %v2058, %v2054
    %v2299 = vpack.c.b16 %v2059, %v2055
    %v2300 = vpack.c.b16 %v2064, %v2060
    %v2301 = vpack.c.b16 %v2065, %v2061
    %v2302 = vpack.c.b16 %v2066, %v2062
    %v2303 = vpack.c.b16 %v2067, %v2063
    %v2304 = vpack.c.b16 %v2072, %v2068
    %v2305 = vpack.c.b16 %v2073, %v2069
    %v2306 = vpack.c.b16 %v2074, %v2070
    %v2307 = vpack.c.b16 %v2075, %v2071
    %v2308 = vpack.c.b16 %v2080, %v2076
    %v2309 = vpack.c.b16 %v2081, %v2077
    %v2310 = vpack.c.b16 %v2082, %v2078
    %v2311 = vpack.c.b16 %v2083, %v2079
    %v2312 = vpack.c.b16 %v2088, %v2084
    %v2313 = vpack.c.b16 %v2089, %v2085
    %v2314 = vpack.c.b16 %v2090, %v2086
    %v2315 = vpack.c.b16 %v2091, %v2087
    %v2316 = vpack.c.b16 %v2096, %v2092
    %v2317 = vpack.c.b16 %v2097, %v2093
    %v2318 = vpack.c.b16 %v2098, %v2094
    %v2319 = vpack.c.b16 %v2099, %v2095
    %v2320 = vpack.c.b16 %v2104, %v2100
    %v2321 = vpack.c.b16 %v2105, %v2101
    %v2322 = vpack.c.b16 %v2106, %v2102
    %v2323 = vpack.c.b16 %v2107, %v2103
    %v2324 = vpack.c.b16 %v2112, %v2108
    %v2325 = vpack.c.b16 %v2113, %v2109
    %v2326 = vpack.c.b16 %v2114, %v2110
    %v2327 = vpack.c.b16 %v2115, %v2111
    %v2328 = vpack.c.b16 %v2120, %v2116
    %v2329 = vpack.c.b16 %v2121, %v2117
    %v2330 = vpack.c.b16 %v2122, %v2118
    %v2331 = vpack.c.b16 %v2123, %v2119
    %v2332 = vpack.c.b16 %v2128, %v2124
    %v2333 = vpack.c.b16 %v2129, %v2125
    %v2334 = vpack.c.b16 %v2130, %v2126
    %v2335 = vpack.c.b16 %v2131, %v2127
    %v2336 = vpack.c.b16 %v2136, %v2132
    %v2337 = vpack.c.b16 %v2137, %v2133
    %v2338 = vpack.c.b16 %v2138, %v2134
    %v2339 = vpack.c.b16 %v2139, %v2135
    %v2340 = vpack.c.b16 %v2144, %v2140
    %v2341 = vpack.c.b16 %v2145, %v2141
    %v2342 = vpack.c.b16 %v2146, %v2142
    %v2343 = vpack.c.b16 %v2147, %v2143
    %v2344 = vpack.c.b16 %v2152, %v2148
    %v2345 = vpack.c.b16 %v2153, %v2149
    %v2346 = vpack.c.b16 %v2154, %v2150
    %v2347 = vpack.c.b16 %v2155, %v2151
    %v2348 = vpack.c.b16 %v2160, %v2156
    %v2349 = vpack.c.b16 %v2161, %v2157
    %v2350 = vpack.c.b16 %v2162, %v2158
    %v2351 = vpack.c.b16 %v2163, %v2159
    %v2352 = vpack.c.b16 %v2168, %v2164
    %v2353 = vpack.c.b16 %v2169, %v2165
    %v2354 = vpack.c.b16 %v2170, %v2166
    %v2355 = vpack.c.b16 %v2171, %v2167
    %v2356 = vpack.c.b16 %v2176, %v2172
    %v2357 = vpack.c.b16 %v2177, %v2173
    %v2358 = vpack.c.b16 %v2178, %v2174
    %v2359 = vpack.c.b16 %v2179, %v2175
    %v2360 = vpack.c.b16 %v2184, %v2180
    %v2361 = vpack.c.b16 %v2185, %v2181
    %v2362 = vpack.c.b16 %v2186, %v2182
    %v2363 = vpack.c.b16 %v2187, %v2183
    %v2364 = vpack.c.b16 %v2192, %v2188
    %v2365 = vpack.c.b16 %v2193, %v2189
    %v2366 = vpack.c.b16 %v2194, %v2190
    %v2367 = vpack.c.b16 %v2195, %v2191
    %v2368 = vpack.c.b16 %v2200, %v2196
    %v2369 = vpack.c.b16 %v2201, %v2197
    %v2370 = vpack.c.b16 %v2202, %v2198
    %v2371 = vpack.c.b16 %v2203, %v2199
    %v2372 = vpack.c.b16 %v2208, %v2204
    %v2373 = vpack.c.b16 %v2209, %v2205
    %v2374 = vpack.c.b16 %v2210, %v2206
    %v2375 = vpack.c.b16 %v2211, %v2207
    %v2376 = vpack.c.b16 %v2216, %v2212
    %v2377 = vpack.c.b16 %v2217, %v2213
    %v2378 = vpack.c.b16 %v2218, %v2214
    %v2379 = vpack.c.b16 %v2219, %v2215
    %v2380 = vpack.c.b16 %v2224, %v2220
    %v2381 = vpack.c.b16 %v2225, %v2221
    %v2382 = vpack.c.b16 %v2226, %v2222
    %v2383 = vpack.c.b16 %v2227, %v2223
    %v2384 = vpack.c.b16 %v2232, %v2228
    %v2385 = vpack.c.b16 %v2233, %v2229
    %v2386 = vpack.c.b16 %v2234, %v2230
    %v2387 = vpack.c.b16 %v2235, %v2231
    %v2388 = vpack.c.b16 %v2240, %v2236
    %v2389 = vpack.c.b16 %v2241, %v2237
    %v2390 = vpack.c.b16 %v2242, %v2238
    %v2391 = vpack.c.b16 %v2243, %v2239
    %v2392 = vpack.c.b16 %v2248, %v2244
    %v2393 = vpack.c.b16 %v2249, %v2245
    %v2394 = vpack.c.b16 %v2250, %v2246
    %v2395 = vpack.c.b16 %v2251, %v2247
    %v2396 = vpack.c.b16 %v2256, %v2252
    %v2397 = vpack.c.b16 %v2257, %v2253
    %v2398 = vpack.c.b16 %v2258, %v2254
    %v2399 = vpack.c.b16 %v2259, %v2255
    %v2400 = vpack.c.b16 %v2264, %v2260
    %v2401 = vpack.c.b16 %v2265, %v2261
    %v2402 = vpack.c.b16 %v2266, %v2262
    %v2403 = vpack.c.b16 %v2267, %v2263
    %v2404 = vpack.c.b16 %v2272, %v2268
    %v2405 = vpack.c.b16 %v2273, %v2269
    %v2406 = vpack.c.b16 %v2274, %v2270
    %v2407 = vpack.c.b16 %v2275, %v2271
    %v2408 = vpack.c.b16 %v2280, %v2276
    %v2409 = vpack.c.b16 %v2281, %v2277
    %v2410 = vpack.c.b16 %v2282, %v2278
    %v2411 = vpack.c.b16 %v2283, %v2279
    %2540 = vmatprep.subr.bf16.mxu0 %v2285
    %2541 = vmatpush1.bf16.msra.mxu0 %v2284
    %2542 = vmatprep.subr.bf16.mxu0 %v2289
    %2543 = vmatpush1.bf16.msra.mxu0 %v2288
    %2544 = vmatprep.subr.bf16.mxu0 %v2293
    %2545 = vmatpush1.bf16.msra.mxu0 %v2292
    %2546 = vmatprep.subr.bf16.mxu0 %v2297
    %2547 = vmatpush1.bf16.msra.mxu0 %v2296
    %2548 = vmatprep.subr.bf16.mxu0 %v2301
    %2549 = vmatpush1.bf16.msra.mxu0 %v2300
    %2550 = vmatprep.subr.bf16.mxu0 %v2305
    %2551 = vmatpush1.bf16.msra.mxu0 %v2304
    %2552 = vmatprep.subr.bf16.mxu0 %v2309
    %2553 = vmatpush1.bf16.msra.mxu0 %v2308
    %2554 = vmatprep.subr.bf16.mxu0 %v2313
    %2555 = vmatpush1.bf16.msra.mxu0 %v2312
    %2556 = vmatprep.subr.bf16.mxu0 %v2317
    %2557 = vmatpush1.bf16.msra.mxu0 %v2316
    %2558 = vmatprep.subr.bf16.mxu0 %v2321
    %2559 = vmatpush1.bf16.msra.mxu0 %v2320
    %2560 = vmatprep.subr.bf16.mxu0 %v2325
    %2561 = vmatpush1.bf16.msra.mxu0 %v2324
    %2562 = vmatprep.subr.bf16.mxu0 %v2329
    %2563 = vmatpush1.bf16.msra.mxu0 %v2328
    %2564 = vmatprep.subr.bf16.mxu0 %v2333
    %2565 = vmatpush1.bf16.msra.mxu0 %v2332
    %2566 = vmatprep.subr.bf16.mxu0 %v2337
    %2567 = vmatpush1.bf16.msra.mxu0 %v2336
    %2568 = vmatprep.subr.bf16.mxu0 %v2341
    %2569 = vmatpush1.bf16.msra.mxu0 %v2340
    %2570 = vmatprep.subr.bf16.mxu0 %v2345
    %2571 = vmatpush1.bf16.msra.mxu0 %v2344
    %2572 = vmatprep.mubr.bf16.mxu0 %v1743
    %2573 = vmatmul.mubr.bf16.gmra.mrb[0].mxu0 %v1742
    %v2574 = vpop.f32.mrb[0].mxu0
    %v2575 = vadd.f32 %v1883, %v2574
    %v2576 = vpop.f32.mrb[0].mxu0
    %v2577 = vadd.f32 %v1887, %v2576
    %v2578 = vpop.f32.mrb[0].mxu0
    %v2579 = vadd.f32 %v1883, %v2578
    %v2580 = vpop.f32.mrb[0].mxu0
    %v2581 = vadd.f32 %v1887, %v2580
    %2582 = vmatprep.mubr.bf16.mxu0 %v1747
    %2583 = vmatmul.mubr.bf16.gmra.mrb[0].mxu0 %v1746
    %v2584 = vpop.f32.mrb[0].mxu0
    %v2585 = vadd.f32 %v1883, %v2584
    %v2586 = vpop.f32.mrb[0].mxu0
    %v2587 = vadd.f32 %v1887, %v2586
    %v2588 = vpop.f32.mrb[0].mxu0
    %v2589 = vadd.f32 %v1883, %v2588
    %v2590 = vpop.f32.mrb[0].mxu0
    %v2591 = vadd.f32 %v1887, %v2590
    %2592 = vdwg.mxu0
    %2593 = vmatprep.subr.bf16.mxu0 %v2349
    %2594 = vmatpush1.bf16.msra.mxu0 %v2348
    %2595 = vmatprep.subr.bf16.mxu0 %v2353
    %2596 = vmatpush1.bf16.msra.mxu0 %v2352
    %2597 = vmatprep.subr.bf16.mxu0 %v2357
    %2598 = vmatpush1.bf16.msra.mxu0 %v2356
    %2599 = vmatprep.subr.bf16.mxu0 %v2361
    %2600 = vmatpush1.bf16.msra.mxu0 %v2360
    %2601 = vmatprep.subr.bf16.mxu0 %v2365
    %2602 = vmatpush1.bf16.msra.mxu0 %v2364
    %2603 = vmatprep.subr.bf16.mxu0 %v2369
    %2604 = vmatpush1.bf16.msra.mxu0 %v2368
    %2605 = vmatprep.subr.bf16.mxu0 %v2373
    %2606 = vmatpush1.bf16.msra.mxu0 %v2372
    %2607 = vmatprep.subr.bf16.mxu0 %v2377
    %2608 = vmatpush1.bf16.msra.mxu0 %v2376
    %2609 = vmatprep.subr.bf16.mxu0 %v2381
    %2610 = vmatpush1.bf16.msra.mxu0 %v2380
    %2611 = vmatprep.subr.bf16.mxu0 %v2385
    %2612 = vmatpush1.bf16.msra.mxu0 %v2384
    %2613 = vmatprep.subr.bf16.mxu0 %v2389
    %2614 = vmatpush1.bf16.msra.mxu0 %v2388
    %2615 = vmatprep.subr.bf16.mxu0 %v2393
    %2616 = vmatpush1.bf16.msra.mxu0 %v2392
    %2617 = vmatprep.subr.bf16.mxu0 %v2397
    %2618 = vmatpush1.bf16.msra.mxu0 %v2396
    %2619 = vmatprep.subr.bf16.mxu0 %v2401
    %2620 = vmatpush1.bf16.msra.mxu0 %v2400
    %2621 = vmatprep.subr.bf16.mxu0 %v2405
    %2622 = vmatpush1.bf16.msra.mxu0 %v2404
    %2623 = vmatprep.subr.bf16.mxu0 %v2409
    %2624 = vmatpush1.bf16.msra.mxu0 %v2408
    %2625 = vmatprep.mubr.bf16.mxu0 %v1745
    %2626 = vmatmul.mubr.bf16.gmra.mrb[0].mxu0 %v1744
    %v2627 = vpop.f32.mrb[0].mxu0
    %v2628 = vadd.f32 %v2575, %v2627
    %v2629 = vpop.f32.mrb[0].mxu0
    %v2630 = vadd.f32 %v2577, %v2629
    %v2631 = vpop.f32.mrb[0].mxu0
    %v2632 = vadd.f32 %v2579, %v2631
    %v2633 = vpop.f32.mrb[0].mxu0
    %v2634 = vadd.f32 %v2581, %v2633
    %2635 = vmatprep.mubr.bf16.mxu0 %v1749
    %2636 = vmatmul.mubr.bf16.gmra.mrb[0].mxu0 %v1748
    %v2637 = vpop.f32.mrb[0].mxu0
    %v2638 = vadd.f32 %v2585, %v2637
    %v2639 = vpop.f32.mrb[0].mxu0
    %v2640 = vadd.f32 %v2587, %v2639
    %v2641 = vpop.f32.mrb[0].mxu0
    %v2642 = vadd.f32 %v2589, %v2641
    %v2643 = vpop.f32.mrb[0].mxu0
    %v2644 = vadd.f32 %v2591, %v2643
    %2645 = vdwg.mxu0
    %2646 = vmatprep.subr.bf16.mxu0 %v2287
    %2647 = vmatpush1.bf16.msra.mxu0 %v2286
    %2648 = vmatprep.subr.bf16.mxu0 %v2291
    %2649 = vmatpush1.bf16.msra.mxu0 %v2290
    %2650 = vmatprep.subr.bf16.mxu0 %v2295
    %2651 = vmatpush1.bf16.msra.mxu0 %v2294
    %2652 = vmatprep.subr.bf16.mxu0 %v2299
    %2653 = vmatpush1.bf16.msra.mxu0 %v2298
    %2654 = vmatprep.subr.bf16.mxu0 %v2303
    %2655 = vmatpush1.bf16.msra.mxu0 %v2302
    %2656 = vmatprep.subr.bf16.mxu0 %v2307
    %2657 = vmatpush1.bf16.msra.mxu0 %v2306
    %2658 = vmatprep.subr.bf16.mxu0 %v2311
    %2659 = vmatpush1.bf16.msra.mxu0 %v2310
    %2660 = vmatprep.subr.bf16.mxu0 %v2315
    %2661 = vmatpush1.bf16.msra.mxu0 %v2314
    %2662 = vmatprep.subr.bf16.mxu0 %v2319
    %2663 = vmatpush1.bf16.msra.mxu0 %v2318
    %2664 = vmatprep.subr.bf16.mxu0 %v2323
    %2665 = vmatpush1.bf16.msra.mxu0 %v2322
    %2666 = vmatprep.subr.bf16.mxu0 %v2327
    %2667 = vmatpush1.bf16.msra.mxu0 %v2326
    %2668 = vmatprep.subr.bf16.mxu0 %v2331
    %2669 = vmatpush1.bf16.msra.mxu0 %v2330
    %2670 = vmatprep.subr.bf16.mxu0 %v2335
    %2671 = vmatpush1.bf16.msra.mxu0 %v2334
    %2672 = vmatprep.subr.bf16.mxu0 %v2339
    %2673 = vmatpush1.bf16.msra.mxu0 %v2338
    %2674 = vmatprep.subr.bf16.mxu0 %v2343
    %2675 = vmatpush1.bf16.msra.mxu0 %v2342
    %2676 = vmatprep.subr.bf16.mxu0 %v2347
    %2677 = vmatpush1.bf16.msra.mxu0 %v2346
    %2678 = vmatprep.mubr.bf16.mxu0 %v1743
    %2679 = vmatmul.mubr.bf16.gmra.mrb[0].mxu0 %v1742
    %v2680 = vpop.f32.mrb[0].mxu0
    %v2681 = vadd.f32 %v1891, %v2680
    %v2682 = vpop.f32.mrb[0].mxu0
    %v2683 = vadd.f32 %v1895, %v2682
    %v2684 = vpop.f32.mrb[0].mxu0
    %v2685 = vadd.f32 %v1891, %v2684
    %v2686 = vpop.f32.mrb[0].mxu0
    %v2687 = vadd.f32 %v1895, %v2686
    %2688 = vmatprep.mubr.bf16.mxu0 %v1747
    %2689 = vmatmul.mubr.bf16.gmra.mrb[0].mxu0 %v1746
    %v2690 = vpop.f32.mrb[0].mxu0
    %v2691 = vadd.f32 %v1891, %v2690
    %v2692 = vpop.f32.mrb[0].mxu0
    %v2693 = vadd.f32 %v1895, %v2692
    %v2694 = vpop.f32.mrb[0].mxu0
    %v2695 = vadd.f32 %v1891, %v2694
    %v2696 = vpop.f32.mrb[0].mxu0
    %v2697 = vadd.f32 %v1895, %v2696
    %2698 = vdwg.mxu0
    %2699 = vmatprep.subr.bf16.mxu0 %v2351
    %2700 = vmatpush1.bf16.msra.mxu0 %v2350
    %2701 = vmatprep.subr.bf16.mxu0 %v2355
    %2702 = vmatpush1.bf16.msra.mxu0 %v2354
    %2703 = vmatprep.subr.bf16.mxu0 %v2359
    %2704 = vmatpush1.bf16.msra.mxu0 %v2358
    %2705 = vmatprep.subr.bf16.mxu0 %v2363
    %2706 = vmatpush1.bf16.msra.mxu0 %v2362
    %2707 = vmatprep.subr.bf16.mxu0 %v2367
    %2708 = vmatpush1.bf16.msra.mxu0 %v2366
    %2709 = vmatprep.subr.bf16.mxu0 %v2371
    %2710 = vmatpush1.bf16.msra.mxu0 %v2370
    %2711 = vmatprep.subr.bf16.mxu0 %v2375
    %2712 = vmatpush1.bf16.msra.mxu0 %v2374
    %2713 = vmatprep.subr.bf16.mxu0 %v2379
    %2714 = vmatpush1.bf16.msra.mxu0 %v2378
    %2715 = vmatprep.subr.bf16.mxu0 %v2383
    %2716 = vmatpush1.bf16.msra.mxu0 %v2382
    %2717 = vmatprep.subr.bf16.mxu0 %v2387
    %2718 = vmatpush1.bf16.msra.mxu0 %v2386
    %2719 = vmatprep.subr.bf16.mxu0 %v2391
    %2720 = vmatpush1.bf16.msra.mxu0 %v2390
    %2721 = vmatprep.subr.bf16.mxu0 %v2395
    %2722 = vmatpush1.bf16.msra.mxu0 %v2394
    %2723 = vmatprep.subr.bf16.mxu0 %v2399
    %2724 = vmatpush1.bf16.msra.mxu0 %v2398
    %2725 = vmatprep.subr.bf16.mxu0 %v2403
    %2726 = vmatpush1.bf16.msra.mxu0 %v2402
    %2727 = vmatprep.subr.bf16.mxu0 %v2407
    %2728 = vmatpush1.bf16.msra.mxu0 %v2406
    %2729 = vmatprep.subr.bf16.mxu0 %v2411
    %2730 = vmatpush1.bf16.msra.mxu0 %v2410
    %2731 = vmatprep.mubr.bf16.mxu0 %v1745
    %2732 = vmatmul.mubr.bf16.gmra.mrb[0].mxu0 %v1744
    %v2733 = vpop.f32.mrb[0].mxu0
    %v2734 = vadd.f32 %v2681, %v2733
    %v2735 = vpop.f32.mrb[0].mxu0
    %v2736 = vadd.f32 %v2683, %v2735
    %v2737 = vpop.f32.mrb[0].mxu0
    %v2738 = vadd.f32 %v2685, %v2737
    %v2739 = vpop.f32.mrb[0].mxu0
    %v2740 = vadd.f32 %v2687, %v2739
    %2741 = vmatprep.mubr.bf16.mxu0 %v1749
    %2742 = vmatmul.mubr.bf16.gmra.mrb[0].mxu0 %v1748
    %v2743 = vpop.f32.mrb[0].mxu0
    %v2744 = vadd.f32 %v2691, %v2743
    %v2745 = vpop.f32.mrb[0].mxu0
    %v2746 = vadd.f32 %v2693, %v2745
    %v2747 = vpop.f32.mrb[0].mxu0
    %v2748 = vadd.f32 %v2695, %v2747
    %v2749 = vpop.f32.mrb[0].mxu0
    %v2750 = vadd.f32 %v2697, %v2749
    %2751 = vdwg.mxu0
    %v2752 = vmax.f32 %v2628, 0.0
    %v2753 = vmax.f32 %v2630, 0.0
    %v2754 = vmax.f32 %v2734, 0.0
    %v2755 = vmax.f32 %v2736, 0.0
    %v2756 = vmax.f32 %v2632, 0.0
    %v2757 = vmax.f32 %v2634, 0.0
    %v2758 = vmax.f32 %v2738, 0.0
    %v2759 = vmax.f32 %v2740, 0.0
    %v2760 = vmax.f32 %v2638, 0.0
    %v2761 = vmax.f32 %v2640, 0.0
    %v2762 = vmax.f32 %v2744, 0.0
    %v2763 = vmax.f32 %v2746, 0.0
    %v2764 = vmax.f32 %v2642, 0.0
    %v2765 = vmax.f32 %v2644, 0.0
    %v2766 = vmax.f32 %v2748, 0.0
    %v2767 = vmax.f32 %v2750, 0.0
    %v2768 = vpack.c.bf16 %v2756, %v2752
    %v2769 = vpack.c.bf16 %v2757, %v2753
    %v2770 = vpack.c.bf16 %v2758, %v2754
    %v2771 = vpack.c.bf16 %v2759, %v2755
    %v2772 = vpack.c.bf16 %v2764, %v2760
    %v2773 = vpack.c.bf16 %v2765, %v2761
    %v2774 = vpack.c.bf16 %v2766, %v2762
    %v2775 = vpack.c.bf16 %v2767, %v2763
    %v2776 = vld [vmem:[%s5] sm:$0xf]
    %v2777 = vld [vmem:[%s5 + $0x4] sm:$0xf]
    %v2778 = vld [vmem:[%s5 + $0x8] sm:$0xf]
    %v2779 = vld [vmem:[%s5 + $0xc] sm:$0xf]
    %v2780 = vld [vmem:[%s5 + $0x10] sm:$0xf]
    %v2781 = vld [vmem:[%s5 + $0x14] sm:$0xf]
    %v2782 = vld [vmem:[%s5 + $0x18] sm:$0xf]
    %v2783 = vld [vmem:[%s5 + $0x1c] sm:$0xf]
    %v2784 = vld [vmem:[%s5 + $0x20] sm:$0xf]
    %v2785 = vld [vmem:[%s5 + $0x24] sm:$0xf]
    %v2786 = vld [vmem:[%s5 + $0x28] sm:$0xf]
    %v2787 = vld [vmem:[%s5 + $0x2c] sm:$0xf]
    %v2788 = vld [vmem:[%s5 + $0x30] sm:$0xf]
    %v2789 = vld [vmem:[%s5 + $0x34] sm:$0xf]
    %v2790 = vld [vmem:[%s5 + $0x38] sm:$0xf]
    %v2791 = vld [vmem:[%s5 + $0x3c] sm:$0xf]
    %v2792 = vld [vmem:[%s5 + $0x40] sm:$0xf]
    %v2793 = vld [vmem:[%s5 + $0x44] sm:$0xf]
    %v2794 = vld [vmem:[%s5 + $0x48] sm:$0xf]
    %v2795 = vld [vmem:[%s5 + $0x4c] sm:$0xf]
    %v2796 = vld [vmem:[%s5 + $0x50] sm:$0xf]
    %v2797 = vld [vmem:[%s5 + $0x54] sm:$0xf]
    %v2798 = vld [vmem:[%s5 + $0x58] sm:$0xf]
    %v2799 = vld [vmem:[%s5 + $0x5c] sm:$0xf]
    %v2800 = vld [vmem:[%s5 + $0x60] sm:$0xf]
    %v2801 = vld [vmem:[%s5 + $0x64] sm:$0xf]
    %v2802 = vld [vmem:[%s5 + $0x68] sm:$0xf]
    %v2803 = vld [vmem:[%s5 + $0x6c] sm:$0xf]
    %v2804 = vld [vmem:[%s5 + $0x70] sm:$0xf]
    %v2805 = vld [vmem:[%s5 + $0x74] sm:$0xf]
    %v2806 = vld [vmem:[%s5 + $0x78] sm:$0xf]
    %v2807 = vld [vmem:[%s5 + $0x7c] sm:$0xf]
    %v2808 = vld [vmem:[%s5 + $0x80] sm:$0xf]
    %v2809 = vld [vmem:[%s5 + $0x84] sm:$0xf]
    %v2810 = vld [vmem:[%s5 + $0x88] sm:$0xf]
    %v2811 = vld [vmem:[%s5 + $0x8c] sm:$0xf]
    %v2812 = vld [vmem:[%s5 + $0x90] sm:$0xf]
    %v2813 = vld [vmem:[%s5 + $0x94] sm:$0xf]
    %v2814 = vld [vmem:[%s5 + $0x98] sm:$0xf]
    %v2815 = vld [vmem:[%s5 + $0x9c] sm:$0xf]
    %v2816 = vld [vmem:[%s5 + $0xa0] sm:$0xf]
    %v2817 = vld [vmem:[%s5 + $0xa4] sm:$0xf]
    %v2818 = vld [vmem:[%s5 + $0xa8] sm:$0xf]
    %v2819 = vld [vmem:[%s5 + $0xac] sm:$0xf]
    %v2820 = vld [vmem:[%s5 + $0xb0] sm:$0xf]
    %v2821 = vld [vmem:[%s5 + $0xb4] sm:$0xf]
    %v2822 = vld [vmem:[%s5 + $0xb8] sm:$0xf]
    %v2823 = vld [vmem:[%s5 + $0xbc] sm:$0xf]
    %v2824 = vld [vmem:[%s5 + $0xc0] sm:$0xf]
    %v2825 = vld [vmem:[%s5 + $0xc4] sm:$0xf]
    %v2826 = vld [vmem:[%s5 + $0xc8] sm:$0xf]
    %v2827 = vld [vmem:[%s5 + $0xcc] sm:$0xf]
    %v2828 = vld [vmem:[%s5 + $0xd0] sm:$0xf]
    %v2829 = vld [vmem:[%s5 + $0xd4] sm:$0xf]
    %v2830 = vld [vmem:[%s5 + $0xd8] sm:$0xf]
    %v2831 = vld [vmem:[%s5 + $0xdc] sm:$0xf]
    %v2832 = vld [vmem:[%s5 + $0xe0] sm:$0xf]
    %v2833 = vld [vmem:[%s5 + $0xe4] sm:$0xf]
    %v2834 = vld [vmem:[%s5 + $0xe8] sm:$0xf]
    %v2835 = vld [vmem:[%s5 + $0xec] sm:$0xf]
    %v2836 = vld [vmem:[%s5 + $0xf0] sm:$0xf]
    %v2837 = vld [vmem:[%s5 + $0xf4] sm:$0xf]
    %v2838 = vld [vmem:[%s5 + $0xf8] sm:$0xf]
    %v2839 = vld [vmem:[%s5 + $0xfc] sm:$0xf]
    %v2840 = vld [vmem:[%s6] sm:$0x1]
    %v2842 = vlaneseq
    %v2843 = vshrl.u32 %v2842, 7
    %v2844 = vsub.s32 0, %v2843
    %v2845 = vrot.slane %v2840, %v2844
    %v2911 = vunpack.c.l.b16 %v2776
    %v2912 = vunpack.c.l.b16 %v2777
    %v2913 = vunpack.c.l.b16 %v2778
    %v2914 = vunpack.c.l.b16 %v2779
    %v2915 = vunpack.c.l.b16 %v2780
    %v2916 = vunpack.c.l.b16 %v2781
    %v2917 = vunpack.c.l.b16 %v2782
    %v2918 = vunpack.c.l.b16 %v2783
    %v2919 = vunpack.c.l.b16 %v2784
    %v2920 = vunpack.c.l.b16 %v2785
    %v2921 = vunpack.c.l.b16 %v2786
    %v2922 = vunpack.c.l.b16 %v2787
    %v2923 = vunpack.c.l.b16 %v2788
    %v2924 = vunpack.c.l.b16 %v2789
    %v2925 = vunpack.c.l.b16 %v2790
    %v2926 = vunpack.c.l.b16 %v2791
    %v2927 = vunpack.c.l.b16 %v2792
    %v2928 = vunpack.c.l.b16 %v2793
    %v2929 = vunpack.c.l.b16 %v2794
    %v2930 = vunpack.c.l.b16 %v2795
    %v2931 = vunpack.c.l.b16 %v2796
    %v2932 = vunpack.c.l.b16 %v2797
    %v2933 = vunpack.c.l.b16 %v2798
    %v2934 = vunpack.c.l.b16 %v2799
    %v2935 = vunpack.c.l.b16 %v2800
    %v2936 = vunpack.c.l.b16 %v2801
    %v2937 = vunpack.c.l.b16 %v2802
    %v2938 = vunpack.c.l.b16 %v2803
    %v2939 = vunpack.c.l.b16 %v2804
    %v2940 = vunpack.c.l.b16 %v2805
    %v2941 = vunpack.c.l.b16 %v2806
    %v2942 = vunpack.c.l.b16 %v2807
    %v2943 = vunpack.c.l.b16 %v2808
    %v2944 = vunpack.c.l.b16 %v2809
    %v2945 = vunpack.c.l.b16 %v2810
    %v2946 = vunpack.c.l.b16 %v2811
    %v2947 = vunpack.c.l.b16 %v2812
    %v2948 = vunpack.c.l.b16 %v2813
    %v2949 = vunpack.c.l.b16 %v2814
    %v2950 = vunpack.c.l.b16 %v2815
    %v2951 = vunpack.c.l.b16 %v2816
    %v2952 = vunpack.c.l.b16 %v2817
    %v2953 = vunpack.c.l.b16 %v2818
    %v2954 = vunpack.c.l.b16 %v2819
    %v2955 = vunpack.c.l.b16 %v2820
    %v2956 = vunpack.c.l.b16 %v2821
    %v2957 = vunpack.c.l.b16 %v2822
    %v2958 = vunpack.c.l.b16 %v2823
    %v2959 = vunpack.c.l.b16 %v2824
    %v2960 = vunpack.c.l.b16 %v2825
    %v2961 = vunpack.c.l.b16 %v2826
    %v2962 = vunpack.c.l.b16 %v2827
    %v2963 = vunpack.c.l.b16 %v2828
    %v2964 = vunpack.c.l.b16 %v2829
    %v2965 = vunpack.c.l.b16 %v2830
    %v2966 = vunpack.c.l.b16 %v2831
    %v2967 = vunpack.c.l.b16 %v2832
    %v2968 = vunpack.c.l.b16 %v2833
    %v2969 = vunpack.c.l.b16 %v2834
    %v2970 = vunpack.c.l.b16 %v2835
    %v2971 = vunpack.c.l.b16 %v2836
    %v2972 = vunpack.c.l.b16 %v2837
    %v2973 = vunpack.c.l.b16 %v2838
    %v2974 = vunpack.c.l.b16 %v2839
    %v2975 = vpack.c.b16 %v2912, %v2911
    %v2976 = vpack.c.b16 %v2914, %v2913
    %v2977 = vpack.c.b16 %v2916, %v2915
    %v2978 = vpack.c.b16 %v2918, %v2917
    %v2979 = vpack.c.b16 %v2920, %v2919
    %v2980 = vpack.c.b16 %v2922, %v2921
    %v2981 = vpack.c.b16 %v2924, %v2923
    %v2982 = vpack.c.b16 %v2926, %v2925
    %v2983 = vpack.c.b16 %v2928, %v2927
    %v2984 = vpack.c.b16 %v2930, %v2929
    %v2985 = vpack.c.b16 %v2932, %v2931
    %v2986 = vpack.c.b16 %v2934, %v2933
    %v2987 = vpack.c.b16 %v2936, %v2935
    %v2988 = vpack.c.b16 %v2938, %v2937
    %v2989 = vpack.c.b16 %v2940, %v2939
    %v2990 = vpack.c.b16 %v2942, %v2941
    %v2991 = vpack.c.b16 %v2944, %v2943
    %v2992 = vpack.c.b16 %v2946, %v2945
    %v2993 = vpack.c.b16 %v2948, %v2947
    %v2994 = vpack.c.b16 %v2950, %v2949
    %v2995 = vpack.c.b16 %v2952, %v2951
    %v2996 = vpack.c.b16 %v2954, %v2953
    %v2997 = vpack.c.b16 %v2956, %v2955
    %v2998 = vpack.c.b16 %v2958, %v2957
    %v2999 = vpack.c.b16 %v2960, %v2959
    %v3000 = vpack.c.b16 %v2962, %v2961
    %v3001 = vpack.c.b16 %v2964, %v2963
    %v3002 = vpack.c.b16 %v2966, %v2965
    %v3003 = vpack.c.b16 %v2968, %v2967
    %v3004 = vpack.c.b16 %v2970, %v2969
    %v3005 = vpack.c.b16 %v2972, %v2971
    %v3006 = vpack.c.b16 %v2974, %v2973
    %3039 = vmatprep.subr.bf16.mxu0 0
    %3040 = vmatpush1.bf16.msra.mxu0 %v2975
    %3041 = vmatprep.subr.bf16.mxu0 0
    %3042 = vmatpush1.bf16.msra.mxu0 %v2976
    %3043 = vmatprep.subr.bf16.mxu0 0
    %3044 = vmatpush1.bf16.msra.mxu0 %v2977
    %3045 = vmatprep.subr.bf16.mxu0 0
    %3046 = vmatpush1.bf16.msra.mxu0 %v2978
    %3047 = vmatprep.subr.bf16.mxu0 0
    %3048 = vmatpush1.bf16.msra.mxu0 %v2979
    %3049 = vmatprep.subr.bf16.mxu0 0
    %3050 = vmatpush1.bf16.msra.mxu0 %v2980
    %3051 = vmatprep.subr.bf16.mxu0 0
    %3052 = vmatpush1.bf16.msra.mxu0 %v2981
    %3053 = vmatprep.subr.bf16.mxu0 0
    %3054 = vmatpush1.bf16.msra.mxu0 %v2982
    %3055 = vmatprep.subr.bf16.mxu0 0
    %3056 = vmatpush1.bf16.msra.mxu0 %v2983
    %3057 = vmatprep.subr.bf16.mxu0 0
    %3058 = vmatpush1.bf16.msra.mxu0 %v2984
    %3059 = vmatprep.subr.bf16.mxu0 0
    %3060 = vmatpush1.bf16.msra.mxu0 %v2985
    %3061 = vmatprep.subr.bf16.mxu0 0
    %3062 = vmatpush1.bf16.msra.mxu0 %v2986
    %3063 = vmatprep.subr.bf16.mxu0 0
    %3064 = vmatpush1.bf16.msra.mxu0 %v2987
    %3065 = vmatprep.subr.bf16.mxu0 0
    %3066 = vmatpush1.bf16.msra.mxu0 %v2988
    %3067 = vmatprep.subr.bf16.mxu0 0
    %3068 = vmatpush1.bf16.msra.mxu0 %v2989
    %3069 = vmatprep.subr.bf16.mxu0 0
    %3070 = vmatpush1.bf16.msra.mxu0 %v2990
    %3071 = vmatprep.mubr.bf16.mxu0 %v2769
    %3072 = vmatmul.mubr.bf16.gmra.mrb[0].mxu0 %v2768
    %v3073 = vpop.f32.mrb[0].mxu0
    %v3074 = vadd.f32 %v2845, %v3073
    %v3075 = vpop.f32.mrb[0].mxu0
    %v3076 = vpop.f32.mrb[0].mxu0
    %v3077 = vadd.f32 %v2845, %v3076
    %v3078 = vpop.f32.mrb[0].mxu0
    %3079 = vmatprep.mubr.bf16.mxu0 %v2773
    %3080 = vmatmul.mubr.bf16.gmra.mrb[0].mxu0 %v2772
    %v3081 = vpop.f32.mrb[0].mxu0
    %v3082 = vadd.f32 %v2845, %v3081
    %v3083 = vpop.f32.mrb[0].mxu0
    %v3084 = vpop.f32.mrb[0].mxu0
    %v3085 = vadd.f32 %v2845, %v3084
    %v3086 = vpop.f32.mrb[0].mxu0
    %3087 = vdwg.mxu0
    %3088 = vmatprep.subr.bf16.mxu0 0
    %3089 = vmatpush1.bf16.msra.mxu0 %v2991
    %3090 = vmatprep.subr.bf16.mxu0 0
    %3091 = vmatpush1.bf16.msra.mxu0 %v2992
    %3092 = vmatprep.subr.bf16.mxu0 0
    %3093 = vmatpush1.bf16.msra.mxu0 %v2993
    %3094 = vmatprep.subr.bf16.mxu0 0
    %3095 = vmatpush1.bf16.msra.mxu0 %v2994
    %3096 = vmatprep.subr.bf16.mxu0 0
    %3097 = vmatpush1.bf16.msra.mxu0 %v2995
    %3098 = vmatprep.subr.bf16.mxu0 0
    %3099 = vmatpush1.bf16.msra.mxu0 %v2996
    %3100 = vmatprep.subr.bf16.mxu0 0
    %3101 = vmatpush1.bf16.msra.mxu0 %v2997
    %3102 = vmatprep.subr.bf16.mxu0 0
    %3103 = vmatpush1.bf16.msra.mxu0 %v2998
    %3104 = vmatprep.subr.bf16.mxu0 0
    %3105 = vmatpush1.bf16.msra.mxu0 %v2999
    %3106 = vmatprep.subr.bf16.mxu0 0
    %3107 = vmatpush1.bf16.msra.mxu0 %v3000
    %3108 = vmatprep.subr.bf16.mxu0 0
    %3109 = vmatpush1.bf16.msra.mxu0 %v3001
    %3110 = vmatprep.subr.bf16.mxu0 0
    %3111 = vmatpush1.bf16.msra.mxu0 %v3002
    %3112 = vmatprep.subr.bf16.mxu0 0
    %3113 = vmatpush1.bf16.msra.mxu0 %v3003
    %3114 = vmatprep.subr.bf16.mxu0 0
    %3115 = vmatpush1.bf16.msra.mxu0 %v3004
    %3116 = vmatprep.subr.bf16.mxu0 0
    %3117 = vmatpush1.bf16.msra.mxu0 %v3005
    %3118 = vmatprep.subr.bf16.mxu0 0
    %3119 = vmatpush1.bf16.msra.mxu0 %v3006
    %3120 = vmatprep.mubr.bf16.mxu0 %v2771
    %3121 = vmatmul.mubr.bf16.gmra.mrb[0].mxu0 %v2770
    %v3122 = vpop.f32.mrb[0].mxu0
    %v3123 = vadd.f32 %v3074, %v3122
    %v3124 = vpop.f32.mrb[0].mxu0
    %v3125 = vpop.f32.mrb[0].mxu0
    %v3126 = vadd.f32 %v3077, %v3125
    %v3127 = vpop.f32.mrb[0].mxu0
    %3128 = vmatprep.mubr.bf16.mxu0 %v2775
    %3129 = vmatmul.mubr.bf16.gmra.mrb[0].mxu0 %v2774
    %v3130 = vpop.f32.mrb[0].mxu0
    %v3131 = vadd.f32 %v3082, %v3130
    %v3132 = vpop.f32.mrb[0].mxu0
    %v3133 = vpop.f32.mrb[0].mxu0
    %v3134 = vadd.f32 %v3085, %v3133
    %v3135 = vpop.f32.mrb[0].mxu0
    %3136 = vdwg.mxu0
    %3137 = vst [vmem:[%s7] sm:$0xff] %v3123
    %3138 = vst [vmem:[%s7 + $0x8] sm:$0xff] %v3126
    %3139 = vst [vmem:[%s7 + $0x10] sm:$0xff] %v3131
    %3140 = vst [vmem:[%s7 + $0x18] sm:$0xff] %v3134
    // Predicated region
    $region38: #{neural_network_forward.1} parent=1 // pred_check
      _
    $region39: #{neural_network_forward.1} parent=1 // pred_check_branch
      %3142 = sbr.rel (0) target = $region41
    $region40: #{neural_network_forward.1} parent=1 // pred_region
      _
    $region41: #{neural_network_forward.1} parent=1 // pred_fallthru
      _
    // Predicated region
    $region42: #{neural_network_forward.1} parent=1 // pred_check
      _
    $region43: #{neural_network_forward.1} parent=1 // pred_check_branch
      %3144 = sbr.rel (0) target = $region45
    $region44: #{neural_network_forward.1} parent=1 // pred_region
      _
    $region45: #{neural_network_forward.1} parent=1 // pred_fallthru
      _
    %3145 = vsyncpa [#allocation3], 1
    %3146 = vsyncpa [#allocation5], 1

</llo_original>
